<compile_context>
chip_gen: v6e
topology: v6e:2x2x1
jax: 0.10.0
libtpu: 0.0.40
codegen_flags: <defaults>
</compile_context>

<pallas_src>
import functools

import jax
import jax.numpy as jnp
from jax import lax
from jax.experimental import pallas as pl
from jax.experimental.pallas import tpu as pltpu


def mha_kernel(x_ref, wq_ref, wkv_ref, wp_ref, bp_ref, o_ref, kv_ref,
               *, num_heads, head_size):
    """One (batch, q_block) grid step.

    x_ref   : (T, C)    full sequence for this batch element (Q/K/V source)
    wq_ref  : (C, C)    packed per-head query weights (head h = cols h*hs:(h+1)*hs)
    wkv_ref : (C, 2C)   packed key|value weights (keys = first C cols, values = last C)
    wp_ref  : (C, C)    output projection, pre-transposed to (in, out)
    bp_ref  : (1, C)    projection bias (f32)
    o_ref   : (Tq, C)   output tile
    kv_ref  : (T, 2C)   f32 VMEM scratch, persists across the q-block axis
    """
    T, C = x_ref.shape
    Tq = o_ref.shape[0]
    qi = pl.program_id(1)

    # K/V projection: one lane-dense (T, C) x (C, 2C) matmul, computed once per
    # batch element (q-block axis is sequential -> scratch residency is safe).
    @pl.when(qi == 0)
    def _():
        kv_ref[...] = jnp.dot(x_ref[...], wkv_ref[...],
                              preferred_element_type=jnp.float32)

    # Q projection for this q block only: slice the resident x tile (no extra DMA).
    row0 = pl.multiple_of(qi * Tq, Tq)
    x_q = x_ref[pl.ds(row0, Tq), :]
    q = jnp.dot(x_q, wq_ref[...], preferred_element_type=jnp.float32)
    # NOTE: the reference module scales by n_embd**-0.5 (C), not head_size**-0.5.
    q = q * (C ** -0.5)

    # Per-tile causal mask as a finite additive bias (avoids full (T,T) mask
    # and inf-inf hazards if padding masks are ever added).
    rows = row0 + lax.broadcasted_iota(jnp.int32, (Tq, T), 0)
    cols = lax.broadcasted_iota(jnp.int32, (Tq, T), 1)
    bias = jnp.where(rows >= cols, 0.0, -1e30).astype(jnp.float32)

    kv = kv_ref[...]               # (T, 2C) f32
    cdt = x_ref.dtype              # MXU operand dtype (bf16 in the demo)

    # Output-projection accumulator, initialized with the projection bias.
    acc = jnp.zeros((Tq, C), jnp.float32) + bp_ref[...].astype(jnp.float32)

    # Small, static head count; each head's temporaries die immediately because
    # its projection contribution is accumulated right away (no concat, no long
    # live ranges).
    for h in range(num_heads):
        lo = h * head_size
        q_h = q[:, lo:lo + head_size].astype(cdt)             # (Tq, hs)
        k_h = kv[:, lo:lo + head_size].astype(cdt)             # (T,  hs)
        v_h = kv[:, C + lo:C + lo + head_size].astype(cdt)     # (T,  hs)

        # scores: contract the head dim of q with the head dim of k (no k.T).
        s = lax.dot_general(q_h, k_h, (((1,), (1,)), ((), ())),
                            preferred_element_type=jnp.float32)   # (Tq, T)
        s = s + bias

        # numerically-stable softmax in f32; divide -> EUP reciprocal + multiply.
        m = jnp.max(s, axis=-1, keepdims=True)
        p = jnp.exp(s - m)
        p = p * pl.reciprocal(jnp.sum(p, axis=-1, keepdims=True), approx=True)

        head_out = jnp.dot(p.astype(cdt), v_h,
                           preferred_element_type=jnp.float32)    # (Tq, hs)

        # Fused output projection: accumulate this head's contribution.
        acc = acc + jnp.dot(head_out.astype(cdt), wp_ref[lo:lo + head_size, :],
                            preferred_element_type=jnp.float32)   # (Tq, C)

    o_ref[...] = acc.astype(o_ref.dtype)


def multi_head_attention(x, wq, wk, wv, wp_t, bp, *, q_block=None):
    """x: (B, T, C); wq/wk/wv: (H, C, hs) per-head, pre-transposed to (in, out);
    wp_t: (C, C) pre-transposed projection; bp: (C,)."""
    B, T, C = x.shape
    H, _, hs = wq.shape
    assert H * hs == C
    if q_block is None:
        q_block = min(T, 128)
    assert T % q_block == 0
    assert q_block == T or q_block % 8 == 0
    n_q = T // q_block

    # Pack per-head weights into fused, lane-dense matrices (layout plumbing in
    # the wrapper, not the kernel):
    #   wq_p  : (C, C)   cols [h*hs:(h+1)*hs] = head h's query weights
    #   wkv_p : (C, 2C)  first C cols = keys (same head layout), last C = values
    wq_p = jnp.transpose(wq, (1, 0, 2)).reshape(C, C)
    wk_p = jnp.transpose(wk, (1, 0, 2)).reshape(C, C)
    wv_p = jnp.transpose(wv, (1, 0, 2)).reshape(C, C)
    wkv_p = jnp.concatenate([wk_p, wv_p], axis=1)
    bp2 = bp.reshape(1, C).astype(jnp.float32)

    kernel = functools.partial(mha_kernel, num_heads=H, head_size=hs)

    return pl.pallas_call(
        kernel,
        out_shape=jax.ShapeDtypeStruct((B, T, C), x.dtype),
        grid=(B, n_q),
        in_specs=[
            # full sequence — constant in q -> resident across the q-block axis
            pl.BlockSpec((pl.Squeezed(), T, C), lambda b, q: (b, 0, 0)),
            # weights: constant index maps -> stay resident, no re-DMA
            pl.BlockSpec((C, C), lambda b, q: (0, 0)),         # Wq packed
            pl.BlockSpec((C, 2 * C), lambda b, q: (0, 0)),     # Wk|Wv packed
            pl.BlockSpec((C, C), lambda b, q: (0, 0)),         # Wproj^T
            pl.BlockSpec((1, C), lambda b, q: (0, 0)),         # proj bias (f32)
        ],
        out_specs=pl.BlockSpec((pl.Squeezed(), q_block, C), lambda b, q: (b, q, 0)),
        scratch_shapes=[pltpu.VMEM((T, 2 * C), jnp.float32)],  # cached K/V per batch elem
        compiler_params=pltpu.CompilerParams(
            # batch axis parallel (megacore); q-block axis sequential so the
            # K/V scratch computed at qi == 0 is valid for qi > 0.
            dimension_semantics=("parallel", "arbitrary"),
            vmem_limit_bytes=64 * 1024 * 1024,
        ),
    )(x, wq_p, wkv_p, wp_t, bp2)


def mha_reference(x, wq, wk, wv, wp_t, bp):
    """Plain-JAX f32 reference mirroring the PyTorch forward (eval mode)."""
    x = x.astype(jnp.float32)
    wq = wq.astype(jnp.float32)
    wk = wk.astype(jnp.float32)
    wv = wv.astype(jnp.float32)
    wp_t = wp_t.astype(jnp.float32)
    bp = bp.astype(jnp.float32)

    B, T, C = x.shape
    H = wq.shape[0]
    causal = jnp.tril(jnp.ones((T, T), dtype=bool))
    outs = []
    for h in range(H):
        q = x @ wq[h]
        k = x @ wk[h]
        v = x @ wv[h]
        s = (q @ jnp.swapaxes(k, -1, -2)) * (C ** -0.5)   # module scales by n_embd
        s = jnp.where(causal, s, -jnp.inf)
        p = jax.nn.softmax(s, axis=-1)
        outs.append(p @ v)
    cat = jnp.concatenate(outs, axis=-1)
    return cat @ wp_t + bp


if __name__ == "__main__":
    # Small, module-consistent shapes; n_embd = 128 so every tile is lane-dense
    # (the real module's n_embd = 384 is also a multiple of 128).
    B, T = 2, 16
    n_embd = 128
    num_heads = 4
    head_size = n_embd // num_heads   # 32

    key = jax.random.PRNGKey(0)
    kx, kq, kk, kv, kp, kb = jax.random.split(key, 6)

    dtype = jnp.bfloat16  # bf16 MXU operands; kernel accumulates/softmaxes in f32
    x = jax.random.normal(kx, (B, T, n_embd), jnp.float32).astype(dtype)
    # PyTorch Linear stores (out, in); generate directly in the pre-transposed
    # (in, out) layout the kernel consumes, stacked per head.
    wq = (jax.random.normal(kq, (num_heads, n_embd, head_size), jnp.float32) * 0.02).astype(dtype)
    wk = (jax.random.normal(kk, (num_heads, n_embd, head_size), jnp.float32) * 0.02).astype(dtype)
    wv = (jax.random.normal(kv, (num_heads, n_embd, head_size), jnp.float32) * 0.02).astype(dtype)
    wp_t = (jax.random.normal(kp, (n_embd, n_embd), jnp.float32) * 0.02).astype(dtype)
    bp = (jax.random.normal(kb, (n_embd,), jnp.float32) * 0.02).astype(jnp.float32)

    # q_block=8 -> 2 q blocks per batch element, exercising the tiled causal
    # mask and the cached-K/V path.
    out = multi_head_attention(x, wq, wk, wv, wp_t, bp, q_block=8)
    out = jax.block_until_ready(out)

    ref = mha_reference(x, wq, wk, wv, wp_t, bp)
    assert out.shape == (B, T, n_embd)
    assert out.dtype == x.dtype
    # bf16 operands with f32 accumulation -> loose tolerance vs f32 reference.
    err = float(jnp.max(jnp.abs(out.astype(jnp.float32) - ref)))
    assert jnp.allclose(out.astype(jnp.float32), ref, atol=1e-2, rtol=5e-2), err

    print("KERNEL_OK")
</pallas_src>

<mosaic_0001>
module attributes {stable_mosaic.version = 11 : i64} {
  func.func @mha_kernel(%arg0: i32, %arg1: i32, %arg2: memref<1x16x128xbf16, #tpu.memory_space<vmem>>, %arg3: memref<128x128xbf16, #tpu.memory_space<vmem>>, %arg4: memref<128x256xbf16, #tpu.memory_space<vmem>>, %arg5: memref<128x128xbf16, #tpu.memory_space<vmem>>, %arg6: memref<1x128xf32, #tpu.memory_space<vmem>>, %arg7: memref<1x8x128xbf16, #tpu.memory_space<vmem>>, %arg8: memref<16x256xf32, #tpu.memory_space<vmem>>) attributes {dimension_semantics = [#tpu.dimension_semantics<parallel>, #tpu.dimension_semantics<arbitrary>], iteration_bounds = array<i64: 2, 2>, scalar_prefetch = 0 : i64, scratch_operands = 1 : i64, tpu.core_type = #tpu.core_type<tc>, window_params = [{transform_indices = @transform_0, window_bounds = array<i64: 1, 16, 128>}, {pipeline_mode = #tpu.pipeline_mode<synchronous>, transform_indices = @transform_1, window_bounds = array<i64: 128, 128>}, {pipeline_mode = #tpu.pipeline_mode<synchronous>, transform_indices = @transform_2, window_bounds = array<i64: 128, 256>}, {pipeline_mode = #tpu.pipeline_mode<synchronous>, transform_indices = @transform_3, window_bounds = array<i64: 128, 128>}, {pipeline_mode = #tpu.pipeline_mode<synchronous>, transform_indices = @transform_4, window_bounds = array<i64: 1, 128>}, {transform_indices = @transform_5, window_bounds = array<i64: 1, 8, 128>}]} {
    %c0_i32 = arith.constant 0 : i32
    %0 = arith.cmpi eq, %arg1, %c0_i32 : i32
    %1 = arith.extui %0 : i1 to i32
    %c0_i32_0 = arith.constant 0 : i32
    %2 = arith.cmpi ne, %1, %c0_i32_0 : i32
    scf.if %2 {
      %c0_40 = arith.constant 0 : index
      %c0_41 = arith.constant 0 : index
      %c0_42 = arith.constant 0 : index
      %125 = vector.load %arg2[%c0_40, %c0_41, %c0_42] : memref<1x16x128xbf16, #tpu.memory_space<vmem>>, vector<1x16x128xbf16>
      %126 = vector.shape_cast %125 : vector<1x16x128xbf16> to vector<16x128xbf16>
      %c0_43 = arith.constant 0 : index
      %c0_44 = arith.constant 0 : index
      %127 = vector.load %arg4[%c0_43, %c0_44] : memref<128x256xbf16, #tpu.memory_space<vmem>>, vector<128x256xbf16>
      %cst_45 = arith.constant dense<0.000000e+00> : vector<16x256xf32>
      %128 = tpu.matmul %126, %127, %cst_45 {dimension_numbers = #tpu.dot_dimension_numbers<[1], [0], [0], [1], [0, 0, 1, 1], [], []>} : vector<16x128xbf16>, vector<128x256xbf16>, vector<16x256xf32> -> vector<16x256xf32>
      %c0_46 = arith.constant 0 : index
      %c0_47 = arith.constant 0 : index
      %129 = vector.load %arg8[%c0_46, %c0_47] : memref<16x256xf32, #tpu.memory_space<vmem>>, vector<16x256xf32>
      tpu.vector_store %arg8[%c0_46, %c0_47], %128 {strides = array<i32>} : memref<16x256xf32, #tpu.memory_space<vmem>>, vector<16x256xf32>,
    } else {
    }
    %c8_i32 = arith.constant 8 : i32
    %3 = arith.muli %arg1, %c8_i32 : i32
    %4 = tpu.assume_multiple %3, 8 : i32
    %c0 = arith.constant 0 : index
    %5 = arith.index_cast %4 : i32 to index
    %c0_1 = arith.constant 0 : index
    %6 = vector.load %arg2[%c0, %5, %c0_1] : memref<1x16x128xbf16, #tpu.memory_space<vmem>>, vector<1x8x128xbf16>
    %7 = vector.shape_cast %6 : vector<1x8x128xbf16> to vector<8x128xbf16>
    %c0_2 = arith.constant 0 : index
    %c0_3 = arith.constant 0 : index
    %8 = vector.load %arg3[%c0_2, %c0_3] : memref<128x128xbf16, #tpu.memory_space<vmem>>, vector<128x128xbf16>
    %cst = arith.constant dense<0.000000e+00> : vector<8x128xf32>
    %9 = tpu.matmul %7, %8, %cst {dimension_numbers = #tpu.dot_dimension_numbers<[1], [0], [0], [1], [0, 0, 1, 1], [], []>} : vector<8x128xbf16>, vector<128x128xbf16>, vector<8x128xf32> -> vector<8x128xf32>
    %cst_4 = arith.constant 0.0883883461 : f32
    %10 = vector.broadcast %cst_4 : f32 to vector<8x128xf32>
    %11 = arith.mulf %9, %10 : vector<8x128xf32>
    %12 = tpu.iota {dimensions = array<i32: 0>} : vector<8x16xi32>
    %13 = vector.broadcast %4 : i32 to vector<8x16xi32>
    %14 = arith.addi %13, %12 : vector<8x16xi32>
    %15 = tpu.iota {dimensions = array<i32: 1>} : vector<8x16xi32>
    %16 = arith.cmpi sge, %14, %15 : vector<8x16xi32>
    %cst_5 = arith.constant 0.000000e+00 : f32
    %cst_6 = arith.constant -1.000000e+30 : f32
    %17 = vector.broadcast %cst_5 : f32 to vector<8x16xf32>
    %18 = vector.broadcast %cst_6 : f32 to vector<8x16xf32>
    %19 = arith.select %16, %17, %18 : vector<8x16xi1>, vector<8x16xf32>
    %c0_7 = arith.constant 0 : index
    %c0_8 = arith.constant 0 : index
    %20 = vector.load %arg8[%c0_7, %c0_8] : memref<16x256xf32, #tpu.memory_space<vmem>>, vector<16x256xf32>
    %cst_9 = arith.constant 0.000000e+00 : f32
    %21 = vector.broadcast %cst_9 : f32 to vector<8x128xf32>
    %c0_10 = arith.constant 0 : index
    %c0_11 = arith.constant 0 : index
    %22 = vector.load %arg6[%c0_10, %c0_11] : memref<1x128xf32, #tpu.memory_space<vmem>>, vector<1x128xf32>
    %23 = vector.broadcast %22 : vector<1x128xf32> to vector<8x128xf32>
    %24 = arith.addf %21, %23 : vector<8x128xf32>
    %25 = vector.extract_strided_slice %11 {offsets = [0, 0], sizes = [8, 32], strides = [1, 1]} : vector<8x128xf32> to vector<8x32xf32>
    %26 = arith.truncf %25 : vector<8x32xf32> to vector<8x32xbf16>
    %27 = vector.extract_strided_slice %20 {offsets = [0, 0], sizes = [16, 32], strides = [1, 1]} : vector<16x256xf32> to vector<16x32xf32>
    %28 = arith.truncf %27 : vector<16x32xf32> to vector<16x32xbf16>
    %29 = vector.extract_strided_slice %20 {offsets = [0, 128], sizes = [16, 32], strides = [1, 1]} : vector<16x256xf32> to vector<16x32xf32>
    %30 = arith.truncf %29 : vector<16x32xf32> to vector<16x32xbf16>
    %cst_12 = arith.constant dense<0.000000e+00> : vector<8x16xf32>
    %31 = tpu.matmul %26, %28, %cst_12 {dimension_numbers = #tpu.dot_dimension_numbers<[1], [1], [0], [0], [0, 0, 1, 0], [], []>} : vector<8x32xbf16>, vector<16x32xbf16>, vector<8x16xf32> -> vector<8x16xf32>
    %32 = arith.addf %31, %19 : vector<8x16xf32>
    %cst_13 = arith.constant dense<0xFF800000> : vector<8xf32>
    %33 = vector.multi_reduction <maximumf>, %32, %cst_13 [1] : vector<8x16xf32> to vector<8xf32>
    %34 = vector.shape_cast %33 : vector<8xf32> to vector<8x1xf32>
    %35 = vector.broadcast %34 : vector<8x1xf32> to vector<8x16xf32>
    %36 = arith.subf %32, %35 : vector<8x16xf32>
    %37 = math.exp %36 : vector<8x16xf32>
    %cst_14 = arith.constant dense<0.000000e+00> : vector<8xf32>
    %38 = vector.multi_reduction <add>, %37, %cst_14 [1] : vector<8x16xf32> to vector<8xf32>
    %39 = vector.shape_cast %38 : vector<8xf32> to vector<8x1xf32>
    %40 = tpu.reciprocal %39 {approx = true} : vector<8x1xf32> -> vector<8x1xf32>
    %41 = vector.broadcast %40 : vector<8x1xf32> to vector<8x16xf32>
    %42 = arith.mulf %37, %41 : vector<8x16xf32>
    %43 = arith.truncf %42 : vector<8x16xf32> to vector<8x16xbf16>
    %cst_15 = arith.constant dense<0.000000e+00> : vector<8x32xf32>
    %44 = tpu.matmul %43, %30, %cst_15 {dimension_numbers = #tpu.dot_dimension_numbers<[1], [0], [0], [1], [0, 0, 1, 1], [], []>} : vector<8x16xbf16>, vector<16x32xbf16>, vector<8x32xf32> -> vector<8x32xf32>
    %45 = arith.truncf %44 : vector<8x32xf32> to vector<8x32xbf16>
    %c0_16 = arith.constant 0 : index
    %c0_17 = arith.constant 0 : index
    %46 = vector.load %arg5[%c0_16, %c0_17] : memref<128x128xbf16, #tpu.memory_space<vmem>>, vector<32x128xbf16>
    %cst_18 = arith.constant dense<0.000000e+00> : vector<8x128xf32>
    %47 = tpu.matmul %45, %46, %cst_18 {dimension_numbers = #tpu.dot_dimension_numbers<[1], [0], [0], [1], [0, 0, 1, 1], [], []>} : vector<8x32xbf16>, vector<32x128xbf16>, vector<8x128xf32> -> vector<8x128xf32>
    %48 = arith.addf %24, %47 : vector<8x128xf32>
    %49 = vector.extract_strided_slice %11 {offsets = [0, 32], sizes = [8, 32], strides = [1, 1]} : vector<8x128xf32> to vector<8x32xf32>
    %50 = arith.truncf %49 : vector<8x32xf32> to vector<8x32xbf16>
    %51 = vector.extract_strided_slice %20 {offsets = [0, 32], sizes = [16, 32], strides = [1, 1]} : vector<16x256xf32> to vector<16x32xf32>
    %52 = arith.truncf %51 : vector<16x32xf32> to vector<16x32xbf16>
    %53 = vector.extract_strided_slice %20 {offsets = [0, 160], sizes = [16, 32], strides = [1, 1]} : vector<16x256xf32> to vector<16x32xf32>
    %54 = arith.truncf %53 : vector<16x32xf32> to vector<16x32xbf16>
    %cst_19 = arith.constant dense<0.000000e+00> : vector<8x16xf32>
    %55 = tpu.matmul %50, %52, %cst_19 {dimension_numbers = #tpu.dot_dimension_numbers<[1], [1], [0], [0], [0, 0, 1, 0], [], []>} : vector<8x32xbf16>, vector<16x32xbf16>, vector<8x16xf32> -> vector<8x16xf32>
    %56 = arith.addf %55, %19 : vector<8x16xf32>
    %cst_20 = arith.constant dense<0xFF800000> : vector<8xf32>
    %57 = vector.multi_reduction <maximumf>, %56, %cst_20 [1] : vector<8x16xf32> to vector<8xf32>
    %58 = vector.shape_cast %57 : vector<8xf32> to vector<8x1xf32>
    %59 = vector.broadcast %58 : vector<8x1xf32> to vector<8x16xf32>
    %60 = arith.subf %56, %59 : vector<8x16xf32>
    %61 = math.exp %60 : vector<8x16xf32>
    %cst_21 = arith.constant dense<0.000000e+00> : vector<8xf32>
    %62 = vector.multi_reduction <add>, %61, %cst_21 [1] : vector<8x16xf32> to vector<8xf32>
    %63 = vector.shape_cast %62 : vector<8xf32> to vector<8x1xf32>
    %64 = tpu.reciprocal %63 {approx = true} : vector<8x1xf32> -> vector<8x1xf32>
    %65 = vector.broadcast %64 : vector<8x1xf32> to vector<8x16xf32>
    %66 = arith.mulf %61, %65 : vector<8x16xf32>
    %67 = arith.truncf %66 : vector<8x16xf32> to vector<8x16xbf16>
    %cst_22 = arith.constant dense<0.000000e+00> : vector<8x32xf32>
    %68 = tpu.matmul %67, %54, %cst_22 {dimension_numbers = #tpu.dot_dimension_numbers<[1], [0], [0], [1], [0, 0, 1, 1], [], []>} : vector<8x16xbf16>, vector<16x32xbf16>, vector<8x32xf32> -> vector<8x32xf32>
    %69 = arith.truncf %68 : vector<8x32xf32> to vector<8x32xbf16>
    %c32 = arith.constant 32 : index
    %c0_23 = arith.constant 0 : index
    %70 = vector.load %arg5[%c32, %c0_23] : memref<128x128xbf16, #tpu.memory_space<vmem>>, vector<32x128xbf16>
    %cst_24 = arith.constant dense<0.000000e+00> : vector<8x128xf32>
    %71 = tpu.matmul %69, %70, %cst_24 {dimension_numbers = #tpu.dot_dimension_numbers<[1], [0], [0], [1], [0, 0, 1, 1], [], []>} : vector<8x32xbf16>, vector<32x128xbf16>, vector<8x128xf32> -> vector<8x128xf32>
    %72 = arith.addf %48, %71 : vector<8x128xf32>
    %73 = vector.extract_strided_slice %11 {offsets = [0, 64], sizes = [8, 32], strides = [1, 1]} : vector<8x128xf32> to vector<8x32xf32>
    %74 = arith.truncf %73 : vector<8x32xf32> to vector<8x32xbf16>
    %75 = vector.extract_strided_slice %20 {offsets = [0, 64], sizes = [16, 32], strides = [1, 1]} : vector<16x256xf32> to vector<16x32xf32>
    %76 = arith.truncf %75 : vector<16x32xf32> to vector<16x32xbf16>
    %77 = vector.extract_strided_slice %20 {offsets = [0, 192], sizes = [16, 32], strides = [1, 1]} : vector<16x256xf32> to vector<16x32xf32>
    %78 = arith.truncf %77 : vector<16x32xf32> to vector<16x32xbf16>
    %cst_25 = arith.constant dense<0.000000e+00> : vector<8x16xf32>
    %79 = tpu.matmul %74, %76, %cst_25 {dimension_numbers = #tpu.dot_dimension_numbers<[1], [1], [0], [0], [0, 0, 1, 0], [], []>} : vector<8x32xbf16>, vector<16x32xbf16>, vector<8x16xf32> -> vector<8x16xf32>
    %80 = arith.addf %79, %19 : vector<8x16xf32>
    %cst_26 = arith.constant dense<0xFF800000> : vector<8xf32>
    %81 = vector.multi_reduction <maximumf>, %80, %cst_26 [1] : vector<8x16xf32> to vector<8xf32>
    %82 = vector.shape_cast %81 : vector<8xf32> to vector<8x1xf32>
    %83 = vector.broadcast %82 : vector<8x1xf32> to vector<8x16xf32>
    %84 = arith.subf %80, %83 : vector<8x16xf32>
    %85 = math.exp %84 : vector<8x16xf32>
    %cst_27 = arith.constant dense<0.000000e+00> : vector<8xf32>
    %86 = vector.multi_reduction <add>, %85, %cst_27 [1] : vector<8x16xf32> to vector<8xf32>
    %87 = vector.shape_cast %86 : vector<8xf32> to vector<8x1xf32>
    %88 = tpu.reciprocal %87 {approx = true} : vector<8x1xf32> -> vector<8x1xf32>
    %89 = vector.broadcast %88 : vector<8x1xf32> to vector<8x16xf32>
    %90 = arith.mulf %85, %89 : vector<8x16xf32>
    %91 = arith.truncf %90 : vector<8x16xf32> to vector<8x16xbf16>
    %cst_28 = arith.constant dense<0.000000e+00> : vector<8x32xf32>
    %92 = tpu.matmul %91, %78, %cst_28 {dimension_numbers = #tpu.dot_dimension_numbers<[1], [0], [0], [1], [0, 0, 1, 1], [], []>} : vector<8x16xbf16>, vector<16x32xbf16>, vector<8x32xf32> -> vector<8x32xf32>
    %93 = arith.truncf %92 : vector<8x32xf32> to vector<8x32xbf16>
    %c64 = arith.constant 64 : index
    %c0_29 = arith.constant 0 : index
    %94 = vector.load %arg5[%c64, %c0_29] : memref<128x128xbf16, #tpu.memory_space<vmem>>, vector<32x128xbf16>
    %cst_30 = arith.constant dense<0.000000e+00> : vector<8x128xf32>
    %95 = tpu.matmul %93, %94, %cst_30 {dimension_numbers = #tpu.dot_dimension_numbers<[1], [0], [0], [1], [0, 0, 1, 1], [], []>} : vector<8x32xbf16>, vector<32x128xbf16>, vector<8x128xf32> -> vector<8x128xf32>
    %96 = arith.addf %72, %95 : vector<8x128xf32>
    %97 = vector.extract_strided_slice %11 {offsets = [0, 96], sizes = [8, 32], strides = [1, 1]} : vector<8x128xf32> to vector<8x32xf32>
    %98 = arith.truncf %97 : vector<8x32xf32> to vector<8x32xbf16>
    %99 = vector.extract_strided_slice %20 {offsets = [0, 96], sizes = [16, 32], strides = [1, 1]} : vector<16x256xf32> to vector<16x32xf32>
    %100 = arith.truncf %99 : vector<16x32xf32> to vector<16x32xbf16>
    %101 = vector.extract_strided_slice %20 {offsets = [0, 224], sizes = [16, 32], strides = [1, 1]} : vector<16x256xf32> to vector<16x32xf32>
    %102 = arith.truncf %101 : vector<16x32xf32> to vector<16x32xbf16>
    %cst_31 = arith.constant dense<0.000000e+00> : vector<8x16xf32>
    %103 = tpu.matmul %98, %100, %cst_31 {dimension_numbers = #tpu.dot_dimension_numbers<[1], [1], [0], [0], [0, 0, 1, 0], [], []>} : vector<8x32xbf16>, vector<16x32xbf16>, vector<8x16xf32> -> vector<8x16xf32>
    %104 = arith.addf %103, %19 : vector<8x16xf32>
    %cst_32 = arith.constant dense<0xFF800000> : vector<8xf32>
    %105 = vector.multi_reduction <maximumf>, %104, %cst_32 [1] : vector<8x16xf32> to vector<8xf32>
    %106 = vector.shape_cast %105 : vector<8xf32> to vector<8x1xf32>
    %107 = vector.broadcast %106 : vector<8x1xf32> to vector<8x16xf32>
    %108 = arith.subf %104, %107 : vector<8x16xf32>
    %109 = math.exp %108 : vector<8x16xf32>
    %cst_33 = arith.constant dense<0.000000e+00> : vector<8xf32>
    %110 = vector.multi_reduction <add>, %109, %cst_33 [1] : vector<8x16xf32> to vector<8xf32>
    %111 = vector.shape_cast %110 : vector<8xf32> to vector<8x1xf32>
    %112 = tpu.reciprocal %111 {approx = true} : vector<8x1xf32> -> vector<8x1xf32>
    %113 = vector.broadcast %112 : vector<8x1xf32> to vector<8x16xf32>
    %114 = arith.mulf %109, %113 : vector<8x16xf32>
    %115 = arith.truncf %114 : vector<8x16xf32> to vector<8x16xbf16>
    %cst_34 = arith.constant dense<0.000000e+00> : vector<8x32xf32>
    %116 = tpu.matmul %115, %102, %cst_34 {dimension_numbers = #tpu.dot_dimension_numbers<[1], [0], [0], [1], [0, 0, 1, 1], [], []>} : vector<8x16xbf16>, vector<16x32xbf16>, vector<8x32xf32> -> vector<8x32xf32>
    %117 = arith.truncf %116 : vector<8x32xf32> to vector<8x32xbf16>
    %c96 = arith.constant 96 : index
    %c0_35 = arith.constant 0 : index
    %118 = vector.load %arg5[%c96, %c0_35] : memref<128x128xbf16, #tpu.memory_space<vmem>>, vector<32x128xbf16>
    %cst_36 = arith.constant dense<0.000000e+00> : vector<8x128xf32>
    %119 = tpu.matmul %117, %118, %cst_36 {dimension_numbers = #tpu.dot_dimension_numbers<[1], [0], [0], [1], [0, 0, 1, 1], [], []>} : vector<8x32xbf16>, vector<32x128xbf16>, vector<8x128xf32> -> vector<8x128xf32>
    %120 = arith.addf %96, %119 : vector<8x128xf32>
    %121 = arith.truncf %120 : vector<8x128xf32> to vector<8x128xbf16>
    %c0_37 = arith.constant 0 : index
    %c0_38 = arith.constant 0 : index
    %c0_39 = arith.constant 0 : index
    %122 = vector.load %arg7[%c0_37, %c0_38, %c0_39] : memref<1x8x128xbf16, #tpu.memory_space<vmem>>, vector<1x8x128xbf16>
    %123 = vector.shape_cast %122 : vector<1x8x128xbf16> to vector<8x128xbf16>
    %124 = vector.shape_cast %121 : vector<8x128xbf16> to vector<1x8x128xbf16>
    tpu.vector_store %arg7[%c0_37, %c0_38, %c0_39], %124 {strides = array<i32>} : memref<1x8x128xbf16, #tpu.memory_space<vmem>>, vector<1x8x128xbf16>,
    return
  }
  func.func @transform_0(%arg0: i32, %arg1: i32) -> (i32, i32, i32) {
    %c0_i32 = arith.constant 0 : i32
    %c0_i32_0 = arith.constant 0 : i32
    %c0_i32_1 = arith.constant 0 : i32
    return %arg0, %c0_i32, %c0_i32_0 : i32, i32, i32
  }
  func.func @transform_1(%arg0: i32, %arg1: i32) -> (i32, i32) {
    %c0_i32 = arith.constant 0 : i32
    %c0_i32_0 = arith.constant 0 : i32
    %c0_i32_1 = arith.constant 0 : i32
    return %c0_i32, %c0_i32_0 : i32, i32
  }
  func.func @transform_2(%arg0: i32, %arg1: i32) -> (i32, i32) {
    %c0_i32 = arith.constant 0 : i32
    %c0_i32_0 = arith.constant 0 : i32
    %c0_i32_1 = arith.constant 0 : i32
    return %c0_i32, %c0_i32_0 : i32, i32
  }
  func.func @transform_3(%arg0: i32, %arg1: i32) -> (i32, i32) {
    %c0_i32 = arith.constant 0 : i32
    %c0_i32_0 = arith.constant 0 : i32
    %c0_i32_1 = arith.constant 0 : i32
    return %c0_i32, %c0_i32_0 : i32, i32
  }
  func.func @transform_4(%arg0: i32, %arg1: i32) -> (i32, i32) {
    %c0_i32 = arith.constant 0 : i32
    %c0_i32_0 = arith.constant 0 : i32
    %c0_i32_1 = arith.constant 0 : i32
    return %c0_i32, %c0_i32_0 : i32, i32
  }
  func.func @transform_5(%arg0: i32, %arg1: i32) -> (i32, i32, i32) {
    %c0_i32 = arith.constant 0 : i32
    %c0_i32_0 = arith.constant 0 : i32
    return %arg0, %arg1, %c0_i32 : i32, i32, i32
  }
}

</mosaic_0001>

<llo_original>
// kernel: tpu_custom_call.1
$region0: #{tpu_custom_call.1}
  #allocation0 [shape = 'u32[]', space=smem, size = 0x4, offset = 0x4, fixed_abs, tag = 'smem constant byte address 0x4 - core index']
  #allocation1 [shape = 'u32[144,128]{1,0:T(1,128)}', space=vmem, size = 0x12000, scoped, tag = 'internal scratch']
  #allocation2 [shape = 'f32[16,256]{1,0:T(8,128)}', space=vmem, size = 0x4000, scoped, tag = 'scratch operand']
  %s0 = inlined_call_operand.hbm [shape: bf16[2,16,128], index: 0, kind: input, shape index: {}]
  %s1 = inlined_call_operand.hbm [shape: bf16[128,128], index: 1, kind: input, shape index: {}]
  %s2 = inlined_call_operand.hbm [shape: bf16[128,256], index: 2, kind: input, shape index: {}]
  %s3 = inlined_call_operand.hbm [shape: bf16[128,128], index: 3, kind: input, shape index: {}]
  %s4 = inlined_call_operand.vmem [shape: f32[1,128], index: 4, kind: input, shape index: {}]
  %s5 = inlined_call_operand.hbm [shape: bf16[2,16,128], index: 5, kind: output, shape index: {}]
  %s6 = sld [smem:[#allocation0]]
  $region73: #{tpu_custom_call.1} parent=0
    _
  %s8 = ssub.s32 1, %s6
  %s9 = scalar_select 0, %s8, %s6
  $region1: #{tpu_custom_call.1} parent=0
    #allocation3 [shape = 'u8[8192]{0}', space=vmem, size = 0x2000, scoped, tag = 'input window, operand 0']
    #allocation4 [shape = 's32[2]{0}', space=sflag, size = 0x8, scoped, tag = 'scoped memory for tpu_custom_call.1']
    #allocation5 [shape = 's32[2]{0}', space=sflag, size = 0x8, scoped, tag = 'scoped memory for tpu_custom_call.1']
    #allocation6 [shape = 'u8[32768]{0}', space=vmem, size = 0x8000, scoped, tag = 'input window, operand 1, single buffered']
    #allocation7 [shape = 's32[1]{0}', space=sflag, size = 0x4, scoped, tag = 'scoped memory for tpu_custom_call.1']
    #allocation8 [shape = 'u8[65536]{0}', space=vmem, size = 0x10000, scoped, tag = 'input window, operand 2, single buffered']
    #allocation9 [shape = 'u8[32768]{0}', space=vmem, size = 0x8000, scoped, tag = 'input window, operand 3, single buffered']
    #allocation10 [shape = 's32[1]{0}', space=sflag, size = 0x4, scoped, tag = 'scoped memory for tpu_custom_call.1']
    #allocation11 [shape = 'u8[4096]{0}', space=vmem, size = 0x1000, scoped, tag = 'output window, operand 0']
    %10 = vsyncpa [#allocation4], 0
    %s11 = scalar_lea.sflag [#allocation4], 1
    %12 = vsyncpa %s11, 0
    %13 = vsyncpa [#allocation7], 0
    %14 = vsyncpa [#allocation10], 0
    %15 = vsyncpa [#allocation5], 0
    %s16 = scalar_lea.sflag [#allocation5], 1
    %17 = vsyncpa %s16, 0
    loop: start=0, step=1, limit=6
    $region2: #{tpu_custom_call.1} parent=1 // loop_pre_header
      _
    $region3: #{tpu_custom_call.1} parent=1 // loop_header
      %s19 = sphi 0, %s23
      %p20 = scmp.ge.s32.totalorder %s19, 6
      %s26 = sphi 0, %s38
      %s27 = sphi 0, %s34
      %s28 = sphi 0, %s26
      %s29 = sphi 0, %s27
      %s30 = sphi 0, %s28
      %s31 = sphi 0, %s29
      %s41 = sphi 0, %s43
      %s44 = sphi 0, %s41
      %s45 = sphi 0, %s44
      %s61 = sphi 0, %s45
      %s65 = sphi 0, %s65
      %s67 = sphi 0, %s65
      %s68 = sphi 0, %s67
      %s82 = sphi 0, %s68
      %s86 = sphi 0, %s86
      %s88 = sphi 0, %s86
      %s89 = sphi 0, %s88
      %s103 = sphi 0, %s89
      %s107 = sphi 0, %s107
      %s109 = sphi 0, %s107
      %s110 = sphi 0, %s109
      %s124 = sphi 0, %s110
      %s128 = sphi 0, %s128
      %s130 = sphi 0, %s128
      %s131 = sphi 0, %s130
      %s145 = sphi 0, %s131
      %s153 = sphi 0, %s155
      %s156 = sphi 0, %s153
      %s157 = sphi 0, %s156
      %s173 = sphi 0, %s157
    $region4: #{tpu_custom_call.1} parent=1 // loop_header_branch
      %22 = sbr.rel (%p20) target = $region8
    $region5: #{tpu_custom_call.1} parent=1 // loop_body
      %s24 = ssub.s32 %s19, 1
      %s25 = ssub.s32 %s19, 2
      %s32 = sadd.s32 1, %s27
      %p33 = scmp.ge.s32.totalorder %s32, 2
      %s34 = scalar_select %p33, 0, %s32
      %s35 = sadd.s32 1, %s26
      %s36 = scalar_select %p33, %s35, %s26
      %p37 = scmp.ge.s32.totalorder %s36, 2
      %s38 = scalar_select %p37, 0, %s36
      %s39 = ssub.s32 %s26, %s38
      %p40 = scmp.eq.s32.totalorder %s39, 0
      %s42 = sadd.s32 %s41, 1
      %s43 = scalar_select %p40, %s41, %s42
      %p46 = pneg %p40
      %p47 = scmp.eq.s32.totalorder %s19, 3
      %p48 = por %p46, %p47
      %p49 = scmp.ne.s32.totalorder %s41, %s44
      %p50 = scmp.eq.s32.totalorder %s19, 0
      %p51 = por %p49, %p50
      %p52 = scmp.ne.s32.totalorder %s41, %s44
      %p53 = scmp.eq.s32.totalorder %s24, 3
      %p54 = por %p52, %p53
      %p55 = scmp.ne.s32.totalorder %s44, %s45
      %p56 = scmp.eq.s32.totalorder %s24, 0
      %p57 = por %p55, %p56
      %p58 = scmp.ne.s32.totalorder %s44, %s45
      %p59 = scmp.eq.s32.totalorder %s25, 3
      %p60 = por %p58, %p59
      %p62 = scmp.ne.s32.totalorder %s45, %s61
      %p63 = scmp.eq.s32.totalorder %s25, 0
      %p64 = por %p62, %p63
      %s66 = sadd.s32 %s65, 1
      %p69 = scmp.eq.s32.totalorder %s19, 3
      %p70 = scmp.ne.s32.totalorder %s65, %s67
      %p71 = scmp.eq.s32.totalorder %s19, 0
      %p72 = por %p70, %p71
      %p73 = scmp.ne.s32.totalorder %s65, %s67
      %p74 = scmp.eq.s32.totalorder %s24, 3
      %p75 = por %p73, %p74
      %p76 = scmp.ne.s32.totalorder %s67, %s68
      %p77 = scmp.eq.s32.totalorder %s24, 0
      %p78 = por %p76, %p77
      %p79 = scmp.ne.s32.totalorder %s67, %s68
      %p80 = scmp.eq.s32.totalorder %s25, 3
      %p81 = por %p79, %p80
      %p83 = scmp.ne.s32.totalorder %s68, %s82
      %p84 = scmp.eq.s32.totalorder %s25, 0
      %p85 = por %p83, %p84
      %s87 = sadd.s32 %s86, 1
      %p90 = scmp.eq.s32.totalorder %s19, 3
      %p91 = scmp.ne.s32.totalorder %s86, %s88
      %p92 = scmp.eq.s32.totalorder %s19, 0
      %p93 = por %p91, %p92
      %p94 = scmp.ne.s32.totalorder %s86, %s88
      %p95 = scmp.eq.s32.totalorder %s24, 3
      %p96 = por %p94, %p95
      %p97 = scmp.ne.s32.totalorder %s88, %s89
      %p98 = scmp.eq.s32.totalorder %s24, 0
      %p99 = por %p97, %p98
      %p100 = scmp.ne.s32.totalorder %s88, %s89
      %p101 = scmp.eq.s32.totalorder %s25, 3
      %p102 = por %p100, %p101
      %p104 = scmp.ne.s32.totalorder %s89, %s103
      %p105 = scmp.eq.s32.totalorder %s25, 0
      %p106 = por %p104, %p105
      %s108 = sadd.s32 %s107, 1
      %p111 = scmp.eq.s32.totalorder %s19, 3
      %p112 = scmp.ne.s32.totalorder %s107, %s109
      %p113 = scmp.eq.s32.totalorder %s19, 0
      %p114 = por %p112, %p113
      %p115 = scmp.ne.s32.totalorder %s107, %s109
      %p116 = scmp.eq.s32.totalorder %s24, 3
      %p117 = por %p115, %p116
      %p118 = scmp.ne.s32.totalorder %s109, %s110
      %p119 = scmp.eq.s32.totalorder %s24, 0
      %p120 = por %p118, %p119
      %p121 = scmp.ne.s32.totalorder %s109, %s110
      %p122 = scmp.eq.s32.totalorder %s25, 3
      %p123 = por %p121, %p122
      %p125 = scmp.ne.s32.totalorder %s110, %s124
      %p126 = scmp.eq.s32.totalorder %s25, 0
      %p127 = por %p125, %p126
      %s129 = sadd.s32 %s128, 1
      %p132 = scmp.eq.s32.totalorder %s19, 3
      %p133 = scmp.ne.s32.totalorder %s128, %s130
      %p134 = scmp.eq.s32.totalorder %s19, 0
      %p135 = por %p133, %p134
      %p136 = scmp.ne.s32.totalorder %s128, %s130
      %p137 = scmp.eq.s32.totalorder %s24, 3
      %p138 = por %p136, %p137
      %p139 = scmp.ne.s32.totalorder %s130, %s131
      %p140 = scmp.eq.s32.totalorder %s24, 0
      %p141 = por %p139, %p140
      %p142 = scmp.ne.s32.totalorder %s130, %s131
      %p143 = scmp.eq.s32.totalorder %s25, 3
      %p144 = por %p142, %p143
      %p146 = scmp.ne.s32.totalorder %s131, %s145
      %p147 = scmp.eq.s32.totalorder %s25, 0
      %p148 = por %p146, %p147
      %s149 = ssub.s32 %s26, %s38
      %s150 = ssub.s32 %s27, %s34
      %s151 = sor.u32 %s149, %s150
      %p152 = scmp.eq.s32.totalorder %s151, 0
      %s154 = sadd.s32 %s153, 1
      %s155 = scalar_select %p152, %s153, %s154
      %p158 = pneg %p152
      %p159 = scmp.eq.s32.totalorder %s19, 3
      %p160 = por %p158, %p159
      %p161 = scmp.ne.s32.totalorder %s153, %s156
      %p162 = scmp.eq.s32.totalorder %s19, 0
      %p163 = por %p161, %p162
      %p164 = scmp.ne.s32.totalorder %s153, %s156
      %p165 = scmp.eq.s32.totalorder %s24, 3
      %p166 = por %p164, %p165
      %p167 = scmp.ne.s32.totalorder %s156, %s157
      %p168 = scmp.eq.s32.totalorder %s24, 0
      %p169 = por %p167, %p168
      %p170 = scmp.ne.s32.totalorder %s156, %s157
      %p171 = scmp.eq.s32.totalorder %s25, 3
      %p172 = por %p170, %p171
      %p174 = scmp.ne.s32.totalorder %s157, %s173
      %p175 = scmp.eq.s32.totalorder %s25, 0
      %p176 = por %p174, %p175
      %p177 = scmp.le.s32.totalorder 1, %s19
      %p178 = scmp.lt.s32.totalorder %s19, 5
      %p179 = pnand %p177, %p178
      %p180 = pneg %p179
      // Predicated region
      $region9: #{tpu_custom_call.1} parent=5 // pred_check
        _
      $region10: #{tpu_custom_call.1} parent=5 // pred_check_branch
        %182 = sbr.rel (%p179) target = $region12
      $region11: #{tpu_custom_call.1} parent=5 // pred_region
        %s183 = ssub.s32 %s19, 1
        // Predicated region
        $region13: #{tpu_custom_call.1} parent=11 // pred_check
          %p184 = pneg %p78
        $region14: #{tpu_custom_call.1} parent=11 // pred_check_branch
          %186 = sbr.rel (%p184) target = $region16
        $region15: #{tpu_custom_call.1} parent=11 // pred_region
          %s188 = ssub.s32 1024, 1024
          %189 = vsyncadd [#allocation7], %s188
          %s190 = sshll.u32 [#allocation6], 4
          %s191 = int_to_ptr.vmem [resolvable:$true] %s190
          %196 = dma.hbm_to_vmem [thread:$0]  %s1, 1024, %s191, [#allocation7], 64, 64, 4
        $region16: #{tpu_custom_call.1} parent=11 // pred_fallthru
          _
        // Predicated region
        $region17: #{tpu_custom_call.1} parent=11 // pred_check
          %p197 = pneg %p99
        $region18: #{tpu_custom_call.1} parent=11 // pred_check_branch
          %199 = sbr.rel (%p197) target = $region20
        $region19: #{tpu_custom_call.1} parent=11 // pred_region
          %s201 = ssub.s32 2048, 2048
          %202 = vsyncadd [#allocation7], %s201
          %s203 = sshll.u32 [#allocation8], 4
          %s204 = int_to_ptr.vmem [resolvable:$true] %s203
          %209 = dma.hbm_to_vmem [thread:$0]  %s2, 2048, %s204, [#allocation7], 128, 128, 8
        $region20: #{tpu_custom_call.1} parent=11 // pred_fallthru
          _
        // Predicated region
        $region21: #{tpu_custom_call.1} parent=11 // pred_check
          %p210 = pneg %p120
        $region22: #{tpu_custom_call.1} parent=11 // pred_check_branch
          %212 = sbr.rel (%p210) target = $region24
        $region23: #{tpu_custom_call.1} parent=11 // pred_region
          %s214 = ssub.s32 1024, 1024
          %215 = vsyncadd [#allocation10], %s214
          %s216 = sshll.u32 [#allocation9], 4
          %s217 = int_to_ptr.vmem [resolvable:$true] %s216
          %222 = dma.hbm_to_vmem [thread:$0]  %s3, 1024, %s217, [#allocation10], 64, 64, 4
        $region24: #{tpu_custom_call.1} parent=11 // pred_fallthru
          _
        // Predicated region
        $region25: #{tpu_custom_call.1} parent=11 // pred_check
          %p223 = pneg %p141
        $region26: #{tpu_custom_call.1} parent=11 // pred_check_branch
          %225 = sbr.rel (%p223) target = $region28
        $region27: #{tpu_custom_call.1} parent=11 // pred_region
          _
        $region28: #{tpu_custom_call.1} parent=11 // pred_fallthru
          _
      $region12: #{tpu_custom_call.1} parent=5 // pred_fallthru
        _
      %p226 = scmp.lt.s32.totalorder %s19, 4
      // Predicated region
      $region29: #{tpu_custom_call.1} parent=5 // pred_check
        %p227 = pneg %p226
      $region30: #{tpu_custom_call.1} parent=5 // pred_check_branch
        %229 = sbr.rel (%p227) target = $region32
      $region31: #{tpu_custom_call.1} parent=5 // pred_region
        // Predicated region
        $region33: #{tpu_custom_call.1} parent=31 // pred_check
          %p230 = pneg %p51
        $region34: #{tpu_custom_call.1} parent=31 // pred_check_branch
          %232 = sbr.rel (%p230) target = $region36
        $region35: #{tpu_custom_call.1} parent=31 // pred_region
          %s233 = sand.u32 %s41, 1
          %s234 = scalar_lea.sflag [#allocation4], %s233
          %s235 = sand.u32 %s41, 1
          %s236 = smul.addr %s235, 8
          %s237 = scalar_lea.vmem [#allocation3], %s236
          %s239 = ssub.s32 128, 128
          %240 = vsyncadd %s234, %s239
          %s241 = smul.addr %s26, 2
          %s242 = smul.addr %s241, 64
          %s243 = scalar_lea.hbm %s0, %s242
          %s244 = sshll.u32 %s237, 4
          %s245 = int_to_ptr.vmem [resolvable:$true] %s244
          %250 = dma.hbm_to_vmem [thread:$0]  %s243, 128, %s245, %s234, 64, 64, 4
        $region36: #{tpu_custom_call.1} parent=31 // pred_fallthru
          _
      $region32: #{tpu_custom_call.1} parent=5 // pred_fallthru
        _
      %p251 = scmp.le.s32.totalorder 1, %s19
      %p252 = scmp.lt.s32.totalorder %s19, 5
      %p253 = pnand %p251, %p252
      %p254 = pneg %p253
      // Predicated region
      $region37: #{tpu_custom_call.1} parent=5 // pred_check
        _
      $region38: #{tpu_custom_call.1} parent=5 // pred_check_branch
        %256 = sbr.rel (%p253) target = $region40
      $region39: #{tpu_custom_call.1} parent=5 // pred_region
        %s257 = ssub.s32 %s19, 1
        %s258 = sand.u32 %s44, 1
        %s259 = scalar_lea.sflag [#allocation4], %s258
        %s260 = sand.u32 %s44, 1
        %s261 = smul.addr %s260, 8
        %s262 = scalar_lea.vmem [#allocation3], %s261
        // Predicated region
        $region41: #{tpu_custom_call.1} parent=39 // pred_check
          %p263 = pneg %p57
        $region42: #{tpu_custom_call.1} parent=39 // pred_check_branch
          %265 = sbr.rel (%p263) target = $region44
        $region43: #{tpu_custom_call.1} parent=39 // pred_region
          %266 = dma.done %s259, 128
        $region44: #{tpu_custom_call.1} parent=39 // pred_fallthru
          _
        // Predicated region
        $region45: #{tpu_custom_call.1} parent=39 // pred_check
          %p267 = pneg %p78
        $region46: #{tpu_custom_call.1} parent=39 // pred_check_branch
          %269 = sbr.rel (%p267) target = $region48
        $region47: #{tpu_custom_call.1} parent=39 // pred_region
          %270 = dma.done [#allocation7], 1024
        $region48: #{tpu_custom_call.1} parent=39 // pred_fallthru
          _
        // Predicated region
        $region49: #{tpu_custom_call.1} parent=39 // pred_check
          %p271 = pneg %p99
        $region50: #{tpu_custom_call.1} parent=39 // pred_check_branch
          %273 = sbr.rel (%p271) target = $region52
        $region51: #{tpu_custom_call.1} parent=39 // pred_region
          %274 = dma.done [#allocation7], 2048
        $region52: #{tpu_custom_call.1} parent=39 // pred_fallthru
          _
        // Predicated region
        $region53: #{tpu_custom_call.1} parent=39 // pred_check
          %p275 = pneg %p120
        $region54: #{tpu_custom_call.1} parent=39 // pred_check_branch
          %277 = sbr.rel (%p275) target = $region56
        $region55: #{tpu_custom_call.1} parent=39 // pred_region
          %278 = dma.done [#allocation10], 1024
        $region56: #{tpu_custom_call.1} parent=39 // pred_fallthru
          _
        %s279 = sand.u32 %s44, 1
        %s280 = scalar_lea.sflag [#allocation4], %s279
        %s281 = sand.u32 %s44, 1
        %s282 = smul.addr %s281, 8
        %s283 = scalar_lea.vmem [#allocation3], %s282
        %p284 = pneg %p57
        %p285 = pneg %p54
        %p286 = pneg %p78
        %p287 = pneg %p75
        %p288 = pneg %p99
        %p289 = pneg %p96
        %p290 = pneg %p120
        %p291 = pneg %p117
        %p292 = pneg %p141
        %p293 = pneg %p138
        %p294 = pneg %p169
        %p295 = pneg %p166
        %s296 = sand.u32 %s156, 1
        %s297 = scalar_lea.sflag [#allocation5], %s296
        %s298 = sand.u32 %s156, 1
        %s299 = smul.addr %s298, 4
        %s300 = scalar_lea.vmem [#allocation11], %s299
        %p302 = scmp.eq.s32.totalorder %s29, 0
        // Predicated region
        $region57: #{tpu_custom_call.1} parent=39 // pred_check
          %p303 = pneg %p302
        $region58: #{tpu_custom_call.1} parent=39 // pred_check_branch
          %305 = sbr.rel (%p303) target = $region60
        $region59: #{tpu_custom_call.1} parent=39 // pred_region
          %v306 = vld [vmem:[%s262] sm:$0xf]
          %v307 = vld [vmem:[%s262 + $0x4] sm:$0xf]
          %v308 = vld [vmem:[#allocation8] sm:$0xff]
          %v309 = vld [vmem:[#allocation8 + $0x8] sm:$0xff]
          %v310 = vld [vmem:[#allocation8 + $0x10] sm:$0xff]
          %v311 = vld [vmem:[#allocation8 + $0x18] sm:$0xff]
          %v312 = vld [vmem:[#allocation8 + $0x20] sm:$0xff]
          %v313 = vld [vmem:[#allocation8 + $0x28] sm:$0xff]
          %v314 = vld [vmem:[#allocation8 + $0x30] sm:$0xff]
          %v315 = vld [vmem:[#allocation8 + $0x38] sm:$0xff]
          %v316 = vld [vmem:[#allocation8 + $0x40] sm:$0xff]
          %v317 = vld [vmem:[#allocation8 + $0x48] sm:$0xff]
          %v318 = vld [vmem:[#allocation8 + $0x50] sm:$0xff]
          %v319 = vld [vmem:[#allocation8 + $0x58] sm:$0xff]
          %v320 = vld [vmem:[#allocation8 + $0x60] sm:$0xff]
          %v321 = vld [vmem:[#allocation8 + $0x68] sm:$0xff]
          %v322 = vld [vmem:[#allocation8 + $0x70] sm:$0xff]
          %v323 = vld [vmem:[#allocation8 + $0x78] sm:$0xff]
          %v326 = vunpack.c.l.b16 %v306
          %v327 = vunpack.c.l.b16 %v307
          %v328 = vpack.c.b16 %v327, %v326
          %v346 = vunpack.c.l.b16 %v308
          %v347 = vunpack.c.h.b16 %v308
          %v348 = vunpack.c.l.b16 %v309
          %v349 = vunpack.c.h.b16 %v309
          %v350 = vunpack.c.l.b16 %v310
          %v351 = vunpack.c.h.b16 %v310
          %v352 = vunpack.c.l.b16 %v311
          %v353 = vunpack.c.h.b16 %v311
          %v354 = vunpack.c.l.b16 %v312
          %v355 = vunpack.c.h.b16 %v312
          %v356 = vunpack.c.l.b16 %v313
          %v357 = vunpack.c.h.b16 %v313
          %v358 = vunpack.c.l.b16 %v314
          %v359 = vunpack.c.h.b16 %v314
          %v360 = vunpack.c.l.b16 %v315
          %v361 = vunpack.c.h.b16 %v315
          %v362 = vunpack.c.l.b16 %v316
          %v363 = vunpack.c.h.b16 %v316
          %v364 = vunpack.c.l.b16 %v317
          %v365 = vunpack.c.h.b16 %v317
          %v366 = vunpack.c.l.b16 %v318
          %v367 = vunpack.c.h.b16 %v318
          %v368 = vunpack.c.l.b16 %v319
          %v369 = vunpack.c.h.b16 %v319
          %v370 = vunpack.c.l.b16 %v320
          %v371 = vunpack.c.h.b16 %v320
          %v372 = vunpack.c.l.b16 %v321
          %v373 = vunpack.c.h.b16 %v321
          %v374 = vunpack.c.l.b16 %v322
          %v375 = vunpack.c.h.b16 %v322
          %v376 = vunpack.c.l.b16 %v323
          %v377 = vunpack.c.h.b16 %v323
          %v378 = vpack.c.b16 %v348, %v346
          %v379 = vpack.c.b16 %v349, %v347
          %v380 = vpack.c.b16 %v352, %v350
          %v381 = vpack.c.b16 %v353, %v351
          %v382 = vpack.c.b16 %v356, %v354
          %v383 = vpack.c.b16 %v357, %v355
          %v384 = vpack.c.b16 %v360, %v358
          %v385 = vpack.c.b16 %v361, %v359
          %v386 = vpack.c.b16 %v364, %v362
          %v387 = vpack.c.b16 %v365, %v363
          %v388 = vpack.c.b16 %v368, %v366
          %v389 = vpack.c.b16 %v369, %v367
          %v390 = vpack.c.b16 %v372, %v370
          %v391 = vpack.c.b16 %v373, %v371
          %v392 = vpack.c.b16 %v376, %v374
          %v393 = vpack.c.b16 %v377, %v375
          %410 = vmatprep.subr.bf16.mxu0 %v393
          %411 = vmatpush1.bf16.msra.mxu0 %v392
          %412 = vmatprep.subr.bf16.mxu0 %v391
          %413 = vmatpush1.bf16.msra.mxu0 %v390
          %414 = vmatprep.subr.bf16.mxu0 %v389
          %415 = vmatpush1.bf16.msra.mxu0 %v388
          %416 = vmatprep.subr.bf16.mxu0 %v387
          %417 = vmatpush1.bf16.msra.mxu0 %v386
          %418 = vmatprep.subr.bf16.mxu0 %v385
          %419 = vmatpush1.bf16.msra.mxu0 %v384
          %420 = vmatprep.subr.bf16.mxu0 %v383
          %421 = vmatpush1.bf16.msra.mxu0 %v382
          %422 = vmatprep.subr.bf16.mxu0 %v381
          %423 = vmatpush1.bf16.msra.mxu0 %v380
          %424 = vmatprep.subr.bf16.mxu0 %v379
          %425 = vmatpush1.bf16.msra.mxu0 %v378
          %426 = vmatprep.subr.bf16.mxu0 0
          %427 = vmatpush2.bf16.msra.mxu0 0
          %428 = vmatprep.subr.bf16.mxu0 0
          %429 = vmatpush2.bf16.msra.mxu0 0
          %430 = vmatprep.subr.bf16.mxu0 0
          %431 = vmatpush2.bf16.msra.mxu0 0
          %432 = vmatprep.subr.bf16.mxu0 0
          %433 = vmatpush2.bf16.msra.mxu0 0
          %434 = vmatprep.subr.bf16.mxu0 0
          %435 = vmatpush2.bf16.msra.mxu0 0
          %436 = vmatprep.subr.bf16.mxu0 0
          %437 = vmatpush2.bf16.msra.mxu0 0
          %438 = vmatprep.subr.bf16.mxu0 0
          %439 = vmatpush2.bf16.msra.mxu0 0
          %440 = vmatprep.subr.bf16.mxu0 0
          %441 = vmatpush2.bf16.msra.mxu0 0
          %442 = vmatprep.mubr.bf16.mxu0 0
          %443 = vmatmul.mubr.bf16.gmra.mxu0 %v328
          %v444 = vpop.f32.mrf.mxu0
          %v445 = vadd.f32 0.0, %v444
          %v446 = vpop.f32.mrf.mxu0
          %v447 = vadd.f32 0.0, %v446
          %v448 = vpop.f32.mrf.mxu0
          %v449 = vadd.f32 0.0, %v448
          %v450 = vpop.f32.mrf.mxu0
          %v451 = vadd.f32 0.0, %v450
          %452 = vdwg.mxu0
          %453 = vst [vmem:[#allocation2] sm:$0xff] %v445
          %454 = vst [vmem:[#allocation2 + $0x8] sm:$0xff] %v447
          %455 = vst [vmem:[#allocation2 + $0x10] sm:$0xff] %v449
          %456 = vst [vmem:[#allocation2 + $0x18] sm:$0xff] %v451
        $region60: #{tpu_custom_call.1} parent=39 // pred_fallthru
          _
        %s457 = smul.u32 %s29, 8
        %s458 = sshra.s32 %s457, 3
        %s459 = sand.u32 %s457, 7
        %s460 = smul.addr %s458, 4
        %s461 = scalar_lea.vmem %s262, %s460 [#allocation3]
        %v462 = vld [vmem:[%s461] sm:$0xf]
        %v463 = vld [vmem:[#allocation6] sm:$0xf]
        %v464 = vld [vmem:[#allocation6 + $0x4] sm:$0xf]
        %v465 = vld [vmem:[#allocation6 + $0x8] sm:$0xf]
        %v466 = vld [vmem:[#allocation6 + $0xc] sm:$0xf]
        %v467 = vld [vmem:[#allocation6 + $0x10] sm:$0xf]
        %v468 = vld [vmem:[#allocation6 + $0x14] sm:$0xf]
        %v469 = vld [vmem:[#allocation6 + $0x18] sm:$0xf]
        %v470 = vld [vmem:[#allocation6 + $0x1c] sm:$0xf]
        %v471 = vld [vmem:[#allocation6 + $0x20] sm:$0xf]
        %v472 = vld [vmem:[#allocation6 + $0x24] sm:$0xf]
        %v473 = vld [vmem:[#allocation6 + $0x28] sm:$0xf]
        %v474 = vld [vmem:[#allocation6 + $0x2c] sm:$0xf]
        %v475 = vld [vmem:[#allocation6 + $0x30] sm:$0xf]
        %v476 = vld [vmem:[#allocation6 + $0x34] sm:$0xf]
        %v477 = vld [vmem:[#allocation6 + $0x38] sm:$0xf]
        %v478 = vld [vmem:[#allocation6 + $0x3c] sm:$0xf]
        %v495 = vunpack.c.l.b16 %v463
        %v496 = vunpack.c.l.b16 %v464
        %v497 = vunpack.c.l.b16 %v465
        %v498 = vunpack.c.l.b16 %v466
        %v499 = vunpack.c.l.b16 %v467
        %v500 = vunpack.c.l.b16 %v468
        %v501 = vunpack.c.l.b16 %v469
        %v502 = vunpack.c.l.b16 %v470
        %v503 = vunpack.c.l.b16 %v471
        %v504 = vunpack.c.l.b16 %v472
        %v505 = vunpack.c.l.b16 %v473
        %v506 = vunpack.c.l.b16 %v474
        %v507 = vunpack.c.l.b16 %v475
        %v508 = vunpack.c.l.b16 %v476
        %v509 = vunpack.c.l.b16 %v477
        %v510 = vunpack.c.l.b16 %v478
        %v511 = vpack.c.b16 %v496, %v495
        %v512 = vpack.c.b16 %v498, %v497
        %v513 = vpack.c.b16 %v500, %v499
        %v514 = vpack.c.b16 %v502, %v501
        %v515 = vpack.c.b16 %v504, %v503
        %v516 = vpack.c.b16 %v506, %v505
        %v517 = vpack.c.b16 %v508, %v507
        %v518 = vpack.c.b16 %v510, %v509
        %527 = vmatprep.subr.bf16.mxu0 0
        %528 = vmatpush1.bf16.msra.mxu0 %v518
        %529 = vmatprep.subr.bf16.mxu0 0
        %530 = vmatpush1.bf16.msra.mxu0 %v517
        %531 = vmatprep.subr.bf16.mxu0 0
        %532 = vmatpush1.bf16.msra.mxu0 %v516
        %533 = vmatprep.subr.bf16.mxu0 0
        %534 = vmatpush1.bf16.msra.mxu0 %v515
        %535 = vmatprep.subr.bf16.mxu0 0
        %536 = vmatpush1.bf16.msra.mxu0 %v514
        %537 = vmatprep.subr.bf16.mxu0 0
        %538 = vmatpush1.bf16.msra.mxu0 %v513
        %539 = vmatprep.subr.bf16.mxu0 0
        %540 = vmatpush1.bf16.msra.mxu0 %v512
        %541 = vmatprep.subr.bf16.mxu0 0
        %542 = vmatpush1.bf16.msra.mxu0 %v511
        %543 = vmatprep.subr.bf16.mxu0 0
        %544 = vmatpush2.bf16.msra.mxu0 0
        %545 = vmatprep.subr.bf16.mxu0 0
        %546 = vmatpush2.bf16.msra.mxu0 0
        %547 = vmatprep.subr.bf16.mxu0 0
        %548 = vmatpush2.bf16.msra.mxu0 0
        %549 = vmatprep.subr.bf16.mxu0 0
        %550 = vmatpush2.bf16.msra.mxu0 0
        %551 = vmatprep.subr.bf16.mxu0 0
        %552 = vmatpush2.bf16.msra.mxu0 0
        %553 = vmatprep.subr.bf16.mxu0 0
        %554 = vmatpush2.bf16.msra.mxu0 0
        %555 = vmatprep.subr.bf16.mxu0 0
        %556 = vmatpush2.bf16.msra.mxu0 0
        %557 = vmatprep.subr.bf16.mxu0 0
        %558 = vmatpush2.bf16.msra.mxu0 0
        %559 = vmatprep.mubr.bf16.mxu0 0
        %560 = vmatmul.mubr.bf16.gmra.mxu0 %v462
        %v561 = vpop.f32.mrf.mxu0
        %v562 = vadd.f32 0.0, %v561
        %v563 = vpop.f32.mrf.mxu0
        %v564 = vpop.f32.mrf.mxu0
        %v565 = vpop.f32.mrf.mxu0
        %566 = vdwg.mxu0
        %v567 = vmul.f32 %v562, 0.088388346
        %v568 = vlaneseq
        %v569 = vshrl.u32 %v568, 7
        %v570 = vstv %s457
        %v571 = vadd.s32 %v570, %v569
        %v572 = vlaneseq
        %v573 = vand.u32 %v572, 127
        %vm574 = vcmp.ge.s32.totalorder %v571, %v573
        %v575 = vsel %vm574, 0.0, -1e+30
        %v576 = vld [vmem:[#allocation2] sm:$0xff]
        %v577 = vld [vmem:[#allocation2 + $0x8] sm:$0xff]
        %v578 = vld [vmem:[#allocation2 + $0x10] sm:$0xff]
        %v579 = vld [vmem:[#allocation2 + $0x18] sm:$0xff]
        %v580 = vld [vmem:[%s4] sm:$0x1]
        %v582 = vlaneseq
        %v583 = vshrl.u32 %v582, 7
        %v584 = vsub.s32 0, %v583
        %v585 = vrot.slane %v580, %v584
        %v587 = vadd.f32 %v585, 0.0
        %v588 = vpack.c.bf16 %v567, %v567
        %v589 = vpack.c.bf16 %v578, %v576
        %v590 = vpack.c.bf16 %v579, %v577
        %vm591 = vcmask 261120
        %v593 = vsel %vm591, %v588, 0
        %v596 = vsel %vm591, %v589, 0
        %598 = vmatprep.subr.bf16.mxu0 0
        %599 = vmatpush1.bf16.xpose.msra.mxu0 0
        %600 = vmatprep.subr.bf16.mxu0 0
        %601 = vmatpush1.bf16.xpose.msra.mxu0 0
        %602 = vmatprep.subr.bf16.mxu0 0
        %603 = vmatpush1.bf16.xpose.msra.mxu0 0
        %604 = vmatprep.subr.bf16.mxu0 0
        %605 = vmatpush1.bf16.xpose.msra.mxu0 0
        %606 = vmatprep.subr.bf16.mxu0 0
        %607 = vmatpush1.bf16.xpose.msra.mxu0 0
        %608 = vmatprep.subr.bf16.mxu0 0
        %609 = vmatpush1.bf16.xpose.msra.mxu0 0
        %610 = vmatprep.subr.bf16.mxu0 0
        %611 = vmatpush1.bf16.xpose.msra.mxu0 0
        %612 = vmatprep.subr.bf16.mxu0 0
        %613 = vmatpush1.bf16.xpose.msra.mxu0 %v596
        %614 = vmatprep.subr.bf16.mxu0 0
        %615 = vmatpush2.bf16.xpose.msra.mxu0 0
        %616 = vmatprep.subr.bf16.mxu0 0
        %617 = vmatpush2.bf16.xpose.msra.mxu0 0
        %618 = vmatprep.subr.bf16.mxu0 0
        %619 = vmatpush2.bf16.xpose.msra.mxu0 0
        %620 = vmatprep.subr.bf16.mxu0 0
        %621 = vmatpush2.bf16.xpose.msra.mxu0 0
        %622 = vmatprep.subr.bf16.mxu0 0
        %623 = vmatpush2.bf16.xpose.msra.mxu0 0
        %624 = vmatprep.subr.bf16.mxu0 0
        %625 = vmatpush2.bf16.xpose.msra.mxu0 0
        %626 = vmatprep.subr.bf16.mxu0 0
        %627 = vmatpush2.bf16.xpose.msra.mxu0 0
        %628 = vmatprep.subr.bf16.mxu0 0
        %629 = vmatpush2.bf16.xpose.msra.mxu0 0
        %630 = vmatprep.mubr.bf16.mxu0 0
        %631 = vmatmul.mubr.bf16.gmra.mxu0 %v593
        %v632 = vpop.f32.mrf.mxu0
        %v633 = vadd.f32 %v575, %v632
        %v634 = vpop.f32.mrf.mxu0
        %v635 = vpop.f32.mrf.mxu0
        %v636 = vpop.f32.mrf.mxu0
        %637 = vdwg.mxu0
        %vm638 = vcmask 130048
        %v639 = vsel %vm638, %v633, -inf
        %640 = vmax.xlane.f32.xlu0 %v639
        %v641 = vpop.xlane.xlu0 %640
        %v642 = vsub.f32 %v633, %v641
        %v643 = vmul.f32 %v642, 1.442695
        %v644 = vpow.pop %v643
        %v645 = vsel %vm638, %v644, 0.0
        %646 = vadd.xlane.f32.xlu0 %v645
        %v647 = vpop.xlane.xlu0 %646
        %v648 = vrcp.pop %v647
        %v649 = vmul.f32 %v644, %v648
        %v650 = vpack.c.bf16 %v649, %v649
        %v652 = vsel %vm638, %v650, 0
        %654 = vmatprep.subr.bf16.mxu0 0
        %655 = vmatpush1.bf16.msra.mxu0 0
        %656 = vmatprep.subr.bf16.mxu0 0
        %657 = vmatpush1.bf16.msra.mxu0 0
        %658 = vmatprep.subr.bf16.mxu0 0
        %659 = vmatpush1.bf16.msra.mxu0 0
        %660 = vmatprep.subr.bf16.mxu0 0
        %661 = vmatpush1.bf16.msra.mxu0 0
        %662 = vmatprep.subr.bf16.mxu0 0
        %663 = vmatpush1.bf16.msra.mxu0 0
        %664 = vmatprep.subr.bf16.mxu0 0
        %665 = vmatpush1.bf16.msra.mxu0 0
        %666 = vmatprep.subr.bf16.mxu0 0
        %667 = vmatpush1.bf16.msra.mxu0 0
        %668 = vmatprep.subr.bf16.mxu0 0
        %669 = vmatpush1.bf16.msra.mxu0 %v590
        %670 = vmatprep.subr.bf16.mxu0 0
        %671 = vmatpush2.bf16.msra.mxu0 0
        %672 = vmatprep.subr.bf16.mxu0 0
        %673 = vmatpush2.bf16.msra.mxu0 0
        %674 = vmatprep.subr.bf16.mxu0 0
        %675 = vmatpush2.bf16.msra.mxu0 0
        %676 = vmatprep.subr.bf16.mxu0 0
        %677 = vmatpush2.bf16.msra.mxu0 0
        %678 = vmatprep.subr.bf16.mxu0 0
        %679 = vmatpush2.bf16.msra.mxu0 0
        %680 = vmatprep.subr.bf16.mxu0 0
        %681 = vmatpush2.bf16.msra.mxu0 0
        %682 = vmatprep.subr.bf16.mxu0 0
        %683 = vmatpush2.bf16.msra.mxu0 0
        %684 = vmatprep.subr.bf16.mxu0 0
        %685 = vmatpush2.bf16.msra.mxu0 0
        %686 = vmatprep.mubr.bf16.mxu0 0
        %687 = vmatmul.mubr.bf16.gmra.mxu0 %v652
        %v688 = vpop.f32.mrf.mxu0
        %v689 = vadd.f32 0.0, %v688
        %v690 = vpop.f32.mrf.mxu0
        %v691 = vpop.f32.mrf.mxu0
        %v692 = vpop.f32.mrf.mxu0
        %693 = vdwg.mxu0
        %v694 = vpack.c.bf16 %v689, %v689
        %v695 = vld [vmem:[#allocation9] sm:$0xf]
        %v696 = vld [vmem:[#allocation9 + $0x4] sm:$0xf]
        %v697 = vld [vmem:[#allocation9 + $0x8] sm:$0xf]
        %v698 = vld [vmem:[#allocation9 + $0xc] sm:$0xf]
        %v703 = vunpack.c.l.b16 %v695
        %v704 = vunpack.c.l.b16 %v696
        %v705 = vunpack.c.l.b16 %v697
        %v706 = vunpack.c.l.b16 %v698
        %v707 = vpack.c.b16 %v704, %v703
        %v708 = vpack.c.b16 %v706, %v705
        %v712 = vsel %vm591, %v694, 0
        %714 = vmatprep.subr.bf16.mxu0 0
        %715 = vmatpush1.bf16.msra.mxu0 0
        %716 = vmatprep.subr.bf16.mxu0 0
        %717 = vmatpush1.bf16.msra.mxu0 0
        %718 = vmatprep.subr.bf16.mxu0 0
        %719 = vmatpush1.bf16.msra.mxu0 0
        %720 = vmatprep.subr.bf16.mxu0 0
        %721 = vmatpush1.bf16.msra.mxu0 0
        %722 = vmatprep.subr.bf16.mxu0 0
        %723 = vmatpush1.bf16.msra.mxu0 0
        %724 = vmatprep.subr.bf16.mxu0 0
        %725 = vmatpush1.bf16.msra.mxu0 0
        %726 = vmatprep.subr.bf16.mxu0 0
        %727 = vmatpush1.bf16.msra.mxu0 %v708
        %728 = vmatprep.subr.bf16.mxu0 0
        %729 = vmatpush1.bf16.msra.mxu0 %v707
        %730 = vmatprep.subr.bf16.mxu0 0
        %731 = vmatpush2.bf16.msra.mxu0 0
        %732 = vmatprep.subr.bf16.mxu0 0
        %733 = vmatpush2.bf16.msra.mxu0 0
        %734 = vmatprep.subr.bf16.mxu0 0
        %735 = vmatpush2.bf16.msra.mxu0 0
        %736 = vmatprep.subr.bf16.mxu0 0
        %737 = vmatpush2.bf16.msra.mxu0 0
        %738 = vmatprep.subr.bf16.mxu0 0
        %739 = vmatpush2.bf16.msra.mxu0 0
        %740 = vmatprep.subr.bf16.mxu0 0
        %741 = vmatpush2.bf16.msra.mxu0 0
        %742 = vmatprep.subr.bf16.mxu0 0
        %743 = vmatpush2.bf16.msra.mxu0 0
        %744 = vmatprep.subr.bf16.mxu0 0
        %745 = vmatpush2.bf16.msra.mxu0 0
        %746 = vmatprep.mubr.bf16.mxu0 0
        %747 = vmatmul.mubr.bf16.gmra.mxu0 %v712
        %v748 = vpop.f32.mrf.mxu0
        %v749 = vadd.f32 0.0, %v748
        %v750 = vpop.f32.mrf.mxu0
        %v751 = vpop.f32.mrf.mxu0
        %v752 = vpop.f32.mrf.mxu0
        %753 = vdwg.mxu0
        %v754 = vadd.f32 %v587, %v749
        %756 = vrot.lane.b32.xlu0 %v588, 96
        %v757 = vpop.permute.xlu0 %756
        %759 = vrot.lane.b32.xlu0 %v589, 96
        %v760 = vpop.permute.xlu0 %759
        %v762 = vsel %vm591, %v757, 0
        %v765 = vsel %vm591, %v760, 0
        %767 = vmatprep.subr.bf16.mxu0 0
        %768 = vmatpush1.bf16.xpose.msra.mxu0 0
        %769 = vmatprep.subr.bf16.mxu0 0
        %770 = vmatpush1.bf16.xpose.msra.mxu0 0
        %771 = vmatprep.subr.bf16.mxu0 0
        %772 = vmatpush1.bf16.xpose.msra.mxu0 0
        %773 = vmatprep.subr.bf16.mxu0 0
        %774 = vmatpush1.bf16.xpose.msra.mxu0 0
        %775 = vmatprep.subr.bf16.mxu0 0
        %776 = vmatpush1.bf16.xpose.msra.mxu0 0
        %777 = vmatprep.subr.bf16.mxu0 0
        %778 = vmatpush1.bf16.xpose.msra.mxu0 0
        %779 = vmatprep.subr.bf16.mxu0 0
        %780 = vmatpush1.bf16.xpose.msra.mxu0 0
        %781 = vmatprep.subr.bf16.mxu0 0
        %782 = vmatpush1.bf16.xpose.msra.mxu0 %v765
        %783 = vmatprep.subr.bf16.mxu0 0
        %784 = vmatpush2.bf16.xpose.msra.mxu0 0
        %785 = vmatprep.subr.bf16.mxu0 0
        %786 = vmatpush2.bf16.xpose.msra.mxu0 0
        %787 = vmatprep.subr.bf16.mxu0 0
        %788 = vmatpush2.bf16.xpose.msra.mxu0 0
        %789 = vmatprep.subr.bf16.mxu0 0
        %790 = vmatpush2.bf16.xpose.msra.mxu0 0
        %791 = vmatprep.subr.bf16.mxu0 0
        %792 = vmatpush2.bf16.xpose.msra.mxu0 0
        %793 = vmatprep.subr.bf16.mxu0 0
        %794 = vmatpush2.bf16.xpose.msra.mxu0 0
        %795 = vmatprep.subr.bf16.mxu0 0
        %796 = vmatpush2.bf16.xpose.msra.mxu0 0
        %797 = vmatprep.subr.bf16.mxu0 0
        %798 = vmatpush2.bf16.xpose.msra.mxu0 0
        %799 = vmatprep.mubr.bf16.mxu0 0
        %800 = vmatmul.mubr.bf16.gmra.mxu0 %v762
        %v801 = vpop.f32.mrf.mxu0
        %v802 = vadd.f32 %v575, %v801
        %v803 = vpop.f32.mrf.mxu0
        %v804 = vpop.f32.mrf.mxu0
        %v805 = vpop.f32.mrf.mxu0
        %806 = vdwg.mxu0
        %v807 = vsel %vm638, %v802, -inf
        %808 = vmax.xlane.f32.xlu0 %v807
        %v809 = vpop.xlane.xlu0 %808
        %v810 = vsub.f32 %v802, %v809
        %v811 = vmul.f32 %v810, 1.442695
        %v812 = vpow.pop %v811
        %v813 = vsel %vm638, %v812, 0.0
        %814 = vadd.xlane.f32.xlu0 %v813
        %v815 = vpop.xlane.xlu0 %814
        %v816 = vrcp.pop %v815
        %v817 = vmul.f32 %v812, %v816
        %v818 = vpack.c.bf16 %v817, %v817
        %820 = vrot.lane.b32.xlu0 %v590, 96
        %v821 = vpop.permute.xlu0 %820
        %v824 = vsel %vm638, %v818, 0
        %826 = vmatprep.subr.bf16.mxu0 0
        %827 = vmatpush1.bf16.msra.mxu0 0
        %828 = vmatprep.subr.bf16.mxu0 0
        %829 = vmatpush1.bf16.msra.mxu0 0
        %830 = vmatprep.subr.bf16.mxu0 0
        %831 = vmatpush1.bf16.msra.mxu0 0
        %832 = vmatprep.subr.bf16.mxu0 0
        %833 = vmatpush1.bf16.msra.mxu0 0
        %834 = vmatprep.subr.bf16.mxu0 0
        %835 = vmatpush1.bf16.msra.mxu0 0
        %836 = vmatprep.subr.bf16.mxu0 0
        %837 = vmatpush1.bf16.msra.mxu0 0
        %838 = vmatprep.subr.bf16.mxu0 0
        %839 = vmatpush1.bf16.msra.mxu0 0
        %840 = vmatprep.subr.bf16.mxu0 0
        %841 = vmatpush1.bf16.msra.mxu0 %v821
        %842 = vmatprep.subr.bf16.mxu0 0
        %843 = vmatpush2.bf16.msra.mxu0 0
        %844 = vmatprep.subr.bf16.mxu0 0
        %845 = vmatpush2.bf16.msra.mxu0 0
        %846 = vmatprep.subr.bf16.mxu0 0
        %847 = vmatpush2.bf16.msra.mxu0 0
        %848 = vmatprep.subr.bf16.mxu0 0
        %849 = vmatpush2.bf16.msra.mxu0 0
        %850 = vmatprep.subr.bf16.mxu0 0
        %851 = vmatpush2.bf16.msra.mxu0 0
        %852 = vmatprep.subr.bf16.mxu0 0
        %853 = vmatpush2.bf16.msra.mxu0 0
        %854 = vmatprep.subr.bf16.mxu0 0
        %855 = vmatpush2.bf16.msra.mxu0 0
        %856 = vmatprep.subr.bf16.mxu0 0
        %857 = vmatpush2.bf16.msra.mxu0 0
        %858 = vmatprep.mubr.bf16.mxu0 0
        %859 = vmatmul.mubr.bf16.gmra.mxu0 %v824
        %v860 = vpop.f32.mrf.mxu0
        %v861 = vadd.f32 0.0, %v860
        %v862 = vpop.f32.mrf.mxu0
        %v863 = vpop.f32.mrf.mxu0
        %v864 = vpop.f32.mrf.mxu0
        %865 = vdwg.mxu0
        %v866 = vpack.c.bf16 %v861, %v861
        %v867 = vld [vmem:[#allocation9 + $0x10] sm:$0xf]
        %v868 = vld [vmem:[#allocation9 + $0x14] sm:$0xf]
        %v869 = vld [vmem:[#allocation9 + $0x18] sm:$0xf]
        %v870 = vld [vmem:[#allocation9 + $0x1c] sm:$0xf]
        %v875 = vunpack.c.l.b16 %v867
        %v876 = vunpack.c.l.b16 %v868
        %v877 = vunpack.c.l.b16 %v869
        %v878 = vunpack.c.l.b16 %v870
        %v879 = vpack.c.b16 %v876, %v875
        %v880 = vpack.c.b16 %v878, %v877
        %v884 = vsel %vm591, %v866, 0
        %886 = vmatprep.subr.bf16.mxu0 0
        %887 = vmatpush1.bf16.msra.mxu0 0
        %888 = vmatprep.subr.bf16.mxu0 0
        %889 = vmatpush1.bf16.msra.mxu0 0
        %890 = vmatprep.subr.bf16.mxu0 0
        %891 = vmatpush1.bf16.msra.mxu0 0
        %892 = vmatprep.subr.bf16.mxu0 0
        %893 = vmatpush1.bf16.msra.mxu0 0
        %894 = vmatprep.subr.bf16.mxu0 0
        %895 = vmatpush1.bf16.msra.mxu0 0
        %896 = vmatprep.subr.bf16.mxu0 0
        %897 = vmatpush1.bf16.msra.mxu0 0
        %898 = vmatprep.subr.bf16.mxu0 0
        %899 = vmatpush1.bf16.msra.mxu0 %v880
        %900 = vmatprep.subr.bf16.mxu0 0
        %901 = vmatpush1.bf16.msra.mxu0 %v879
        %902 = vmatprep.subr.bf16.mxu0 0
        %903 = vmatpush2.bf16.msra.mxu0 0
        %904 = vmatprep.subr.bf16.mxu0 0
        %905 = vmatpush2.bf16.msra.mxu0 0
        %906 = vmatprep.subr.bf16.mxu0 0
        %907 = vmatpush2.bf16.msra.mxu0 0
        %908 = vmatprep.subr.bf16.mxu0 0
        %909 = vmatpush2.bf16.msra.mxu0 0
        %910 = vmatprep.subr.bf16.mxu0 0
        %911 = vmatpush2.bf16.msra.mxu0 0
        %912 = vmatprep.subr.bf16.mxu0 0
        %913 = vmatpush2.bf16.msra.mxu0 0
        %914 = vmatprep.subr.bf16.mxu0 0
        %915 = vmatpush2.bf16.msra.mxu0 0
        %916 = vmatprep.subr.bf16.mxu0 0
        %917 = vmatpush2.bf16.msra.mxu0 0
        %918 = vmatprep.mubr.bf16.mxu0 0
        %919 = vmatmul.mubr.bf16.gmra.mxu0 %v884
        %v920 = vpop.f32.mrf.mxu0
        %v921 = vadd.f32 0.0, %v920
        %v922 = vpop.f32.mrf.mxu0
        %v923 = vpop.f32.mrf.mxu0
        %v924 = vpop.f32.mrf.mxu0
        %925 = vdwg.mxu0
        %v926 = vadd.f32 %v754, %v921
        %927 = vrot.lane.b32.xlu0 %v588, 64
        %v928 = vpop.permute.xlu0 %927
        %929 = vrot.lane.b32.xlu0 %v589, 64
        %v930 = vpop.permute.xlu0 %929
        %v932 = vsel %vm591, %v928, 0
        %v935 = vsel %vm591, %v930, 0
        %937 = vmatprep.subr.bf16.mxu0 0
        %938 = vmatpush1.bf16.xpose.msra.mxu0 0
        %939 = vmatprep.subr.bf16.mxu0 0
        %940 = vmatpush1.bf16.xpose.msra.mxu0 0
        %941 = vmatprep.subr.bf16.mxu0 0
        %942 = vmatpush1.bf16.xpose.msra.mxu0 0
        %943 = vmatprep.subr.bf16.mxu0 0
        %944 = vmatpush1.bf16.xpose.msra.mxu0 0
        %945 = vmatprep.subr.bf16.mxu0 0
        %946 = vmatpush1.bf16.xpose.msra.mxu0 0
        %947 = vmatprep.subr.bf16.mxu0 0
        %948 = vmatpush1.bf16.xpose.msra.mxu0 0
        %949 = vmatprep.subr.bf16.mxu0 0
        %950 = vmatpush1.bf16.xpose.msra.mxu0 0
        %951 = vmatprep.subr.bf16.mxu0 0
        %952 = vmatpush1.bf16.xpose.msra.mxu0 %v935
        %953 = vmatprep.subr.bf16.mxu0 0
        %954 = vmatpush2.bf16.xpose.msra.mxu0 0
        %955 = vmatprep.subr.bf16.mxu0 0
        %956 = vmatpush2.bf16.xpose.msra.mxu0 0
        %957 = vmatprep.subr.bf16.mxu0 0
        %958 = vmatpush2.bf16.xpose.msra.mxu0 0
        %959 = vmatprep.subr.bf16.mxu0 0
        %960 = vmatpush2.bf16.xpose.msra.mxu0 0
        %961 = vmatprep.subr.bf16.mxu0 0
        %962 = vmatpush2.bf16.xpose.msra.mxu0 0
        %963 = vmatprep.subr.bf16.mxu0 0
        %964 = vmatpush2.bf16.xpose.msra.mxu0 0
        %965 = vmatprep.subr.bf16.mxu0 0
        %966 = vmatpush2.bf16.xpose.msra.mxu0 0
        %967 = vmatprep.subr.bf16.mxu0 0
        %968 = vmatpush2.bf16.xpose.msra.mxu0 0
        %969 = vmatprep.mubr.bf16.mxu0 0
        %970 = vmatmul.mubr.bf16.gmra.mxu0 %v932
        %v971 = vpop.f32.mrf.mxu0
        %v972 = vadd.f32 %v575, %v971
        %v973 = vpop.f32.mrf.mxu0
        %v974 = vpop.f32.mrf.mxu0
        %v975 = vpop.f32.mrf.mxu0
        %976 = vdwg.mxu0
        %v977 = vsel %vm638, %v972, -inf
        %978 = vmax.xlane.f32.xlu0 %v977
        %v979 = vpop.xlane.xlu0 %978
        %v980 = vsub.f32 %v972, %v979
        %v981 = vmul.f32 %v980, 1.442695
        %v982 = vpow.pop %v981
        %v983 = vsel %vm638, %v982, 0.0
        %984 = vadd.xlane.f32.xlu0 %v983
        %v985 = vpop.xlane.xlu0 %984
        %v986 = vrcp.pop %v985
        %v987 = vmul.f32 %v982, %v986
        %v988 = vpack.c.bf16 %v987, %v987
        %989 = vrot.lane.b32.xlu0 %v590, 64
        %v990 = vpop.permute.xlu0 %989
        %v993 = vsel %vm638, %v988, 0
        %995 = vmatprep.subr.bf16.mxu0 0
        %996 = vmatpush1.bf16.msra.mxu0 0
        %997 = vmatprep.subr.bf16.mxu0 0
        %998 = vmatpush1.bf16.msra.mxu0 0
        %999 = vmatprep.subr.bf16.mxu0 0
        %1000 = vmatpush1.bf16.msra.mxu0 0
        %1001 = vmatprep.subr.bf16.mxu0 0
        %1002 = vmatpush1.bf16.msra.mxu0 0
        %1003 = vmatprep.subr.bf16.mxu0 0
        %1004 = vmatpush1.bf16.msra.mxu0 0
        %1005 = vmatprep.subr.bf16.mxu0 0
        %1006 = vmatpush1.bf16.msra.mxu0 0
        %1007 = vmatprep.subr.bf16.mxu0 0
        %1008 = vmatpush1.bf16.msra.mxu0 0
        %1009 = vmatprep.subr.bf16.mxu0 0
        %1010 = vmatpush1.bf16.msra.mxu0 %v990
        %1011 = vmatprep.subr.bf16.mxu0 0
        %1012 = vmatpush2.bf16.msra.mxu0 0
        %1013 = vmatprep.subr.bf16.mxu0 0
        %1014 = vmatpush2.bf16.msra.mxu0 0
        %1015 = vmatprep.subr.bf16.mxu0 0
        %1016 = vmatpush2.bf16.msra.mxu0 0
        %1017 = vmatprep.subr.bf16.mxu0 0
        %1018 = vmatpush2.bf16.msra.mxu0 0
        %1019 = vmatprep.subr.bf16.mxu0 0
        %1020 = vmatpush2.bf16.msra.mxu0 0
        %1021 = vmatprep.subr.bf16.mxu0 0
        %1022 = vmatpush2.bf16.msra.mxu0 0
        %1023 = vmatprep.subr.bf16.mxu0 0
        %1024 = vmatpush2.bf16.msra.mxu0 0
        %1025 = vmatprep.subr.bf16.mxu0 0
        %1026 = vmatpush2.bf16.msra.mxu0 0
        %1027 = vmatprep.mubr.bf16.mxu0 0
        %1028 = vmatmul.mubr.bf16.gmra.mxu0 %v993
        %v1029 = vpop.f32.mrf.mxu0
        %v1030 = vadd.f32 0.0, %v1029
        %v1031 = vpop.f32.mrf.mxu0
        %v1032 = vpop.f32.mrf.mxu0
        %v1033 = vpop.f32.mrf.mxu0
        %1034 = vdwg.mxu0
        %v1035 = vpack.c.bf16 %v1030, %v1030
        %v1036 = vld [vmem:[#allocation9 + $0x20] sm:$0xf]
        %v1037 = vld [vmem:[#allocation9 + $0x24] sm:$0xf]
        %v1038 = vld [vmem:[#allocation9 + $0x28] sm:$0xf]
        %v1039 = vld [vmem:[#allocation9 + $0x2c] sm:$0xf]
        %v1044 = vunpack.c.l.b16 %v1036
        %v1045 = vunpack.c.l.b16 %v1037
        %v1046 = vunpack.c.l.b16 %v1038
        %v1047 = vunpack.c.l.b16 %v1039
        %v1048 = vpack.c.b16 %v1045, %v1044
        %v1049 = vpack.c.b16 %v1047, %v1046
        %v1053 = vsel %vm591, %v1035, 0
        %1055 = vmatprep.subr.bf16.mxu0 0
        %1056 = vmatpush1.bf16.msra.mxu0 0
        %1057 = vmatprep.subr.bf16.mxu0 0
        %1058 = vmatpush1.bf16.msra.mxu0 0
        %1059 = vmatprep.subr.bf16.mxu0 0
        %1060 = vmatpush1.bf16.msra.mxu0 0
        %1061 = vmatprep.subr.bf16.mxu0 0
        %1062 = vmatpush1.bf16.msra.mxu0 0
        %1063 = vmatprep.subr.bf16.mxu0 0
        %1064 = vmatpush1.bf16.msra.mxu0 0
        %1065 = vmatprep.subr.bf16.mxu0 0
        %1066 = vmatpush1.bf16.msra.mxu0 0
        %1067 = vmatprep.subr.bf16.mxu0 0
        %1068 = vmatpush1.bf16.msra.mxu0 %v1049
        %1069 = vmatprep.subr.bf16.mxu0 0
        %1070 = vmatpush1.bf16.msra.mxu0 %v1048
        %1071 = vmatprep.subr.bf16.mxu0 0
        %1072 = vmatpush2.bf16.msra.mxu0 0
        %1073 = vmatprep.subr.bf16.mxu0 0
        %1074 = vmatpush2.bf16.msra.mxu0 0
        %1075 = vmatprep.subr.bf16.mxu0 0
        %1076 = vmatpush2.bf16.msra.mxu0 0
        %1077 = vmatprep.subr.bf16.mxu0 0
        %1078 = vmatpush2.bf16.msra.mxu0 0
        %1079 = vmatprep.subr.bf16.mxu0 0
        %1080 = vmatpush2.bf16.msra.mxu0 0
        %1081 = vmatprep.subr.bf16.mxu0 0
        %1082 = vmatpush2.bf16.msra.mxu0 0
        %1083 = vmatprep.subr.bf16.mxu0 0
        %1084 = vmatpush2.bf16.msra.mxu0 0
        %1085 = vmatprep.subr.bf16.mxu0 0
        %1086 = vmatpush2.bf16.msra.mxu0 0
        %1087 = vmatprep.mubr.bf16.mxu0 0
        %1088 = vmatmul.mubr.bf16.gmra.mxu0 %v1053
        %v1089 = vpop.f32.mrf.mxu0
        %v1090 = vadd.f32 0.0, %v1089
        %v1091 = vpop.f32.mrf.mxu0
        %v1092 = vpop.f32.mrf.mxu0
        %v1093 = vpop.f32.mrf.mxu0
        %1094 = vdwg.mxu0
        %v1095 = vadd.f32 %v926, %v1090
        %1096 = vrot.lane.b32.xlu0 %v588, 32
        %v1097 = vpop.permute.xlu0 %1096
        %1098 = vrot.lane.b32.xlu0 %v589, 32
        %v1099 = vpop.permute.xlu0 %1098
        %v1101 = vsel %vm591, %v1097, 0
        %v1104 = vsel %vm591, %v1099, 0
        %1106 = vmatprep.subr.bf16.mxu0 0
        %1107 = vmatpush1.bf16.xpose.msra.mxu0 0
        %1108 = vmatprep.subr.bf16.mxu0 0
        %1109 = vmatpush1.bf16.xpose.msra.mxu0 0
        %1110 = vmatprep.subr.bf16.mxu0 0
        %1111 = vmatpush1.bf16.xpose.msra.mxu0 0
        %1112 = vmatprep.subr.bf16.mxu0 0
        %1113 = vmatpush1.bf16.xpose.msra.mxu0 0
        %1114 = vmatprep.subr.bf16.mxu0 0
        %1115 = vmatpush1.bf16.xpose.msra.mxu0 0
        %1116 = vmatprep.subr.bf16.mxu0 0
        %1117 = vmatpush1.bf16.xpose.msra.mxu0 0
        %1118 = vmatprep.subr.bf16.mxu0 0
        %1119 = vmatpush1.bf16.xpose.msra.mxu0 0
        %1120 = vmatprep.subr.bf16.mxu0 0
        %1121 = vmatpush1.bf16.xpose.msra.mxu0 %v1104
        %1122 = vmatprep.subr.bf16.mxu0 0
        %1123 = vmatpush2.bf16.xpose.msra.mxu0 0
        %1124 = vmatprep.subr.bf16.mxu0 0
        %1125 = vmatpush2.bf16.xpose.msra.mxu0 0
        %1126 = vmatprep.subr.bf16.mxu0 0
        %1127 = vmatpush2.bf16.xpose.msra.mxu0 0
        %1128 = vmatprep.subr.bf16.mxu0 0
        %1129 = vmatpush2.bf16.xpose.msra.mxu0 0
        %1130 = vmatprep.subr.bf16.mxu0 0
        %1131 = vmatpush2.bf16.xpose.msra.mxu0 0
        %1132 = vmatprep.subr.bf16.mxu0 0
        %1133 = vmatpush2.bf16.xpose.msra.mxu0 0
        %1134 = vmatprep.subr.bf16.mxu0 0
        %1135 = vmatpush2.bf16.xpose.msra.mxu0 0
        %1136 = vmatprep.subr.bf16.mxu0 0
        %1137 = vmatpush2.bf16.xpose.msra.mxu0 0
        %1138 = vmatprep.mubr.bf16.mxu0 0
        %1139 = vmatmul.mubr.bf16.gmra.mxu0 %v1101
        %v1140 = vpop.f32.mrf.mxu0
        %v1141 = vadd.f32 %v575, %v1140
        %v1142 = vpop.f32.mrf.mxu0
        %v1143 = vpop.f32.mrf.mxu0
        %v1144 = vpop.f32.mrf.mxu0
        %1145 = vdwg.mxu0
        %v1146 = vsel %vm638, %v1141, -inf
        %1147 = vmax.xlane.f32.xlu0 %v1146
        %v1148 = vpop.xlane.xlu0 %1147
        %v1149 = vsub.f32 %v1141, %v1148
        %v1150 = vmul.f32 %v1149, 1.442695
        %v1151 = vpow.pop %v1150
        %v1152 = vsel %vm638, %v1151, 0.0
        %1153 = vadd.xlane.f32.xlu0 %v1152
        %v1154 = vpop.xlane.xlu0 %1153
        %v1155 = vrcp.pop %v1154
        %v1156 = vmul.f32 %v1151, %v1155
        %v1157 = vpack.c.bf16 %v1156, %v1156
        %1158 = vrot.lane.b32.xlu0 %v590, 32
        %v1159 = vpop.permute.xlu0 %1158
        %v1162 = vsel %vm638, %v1157, 0
        %1164 = vmatprep.subr.bf16.mxu0 0
        %1165 = vmatpush1.bf16.msra.mxu0 0
        %1166 = vmatprep.subr.bf16.mxu0 0
        %1167 = vmatpush1.bf16.msra.mxu0 0
        %1168 = vmatprep.subr.bf16.mxu0 0
        %1169 = vmatpush1.bf16.msra.mxu0 0
        %1170 = vmatprep.subr.bf16.mxu0 0
        %1171 = vmatpush1.bf16.msra.mxu0 0
        %1172 = vmatprep.subr.bf16.mxu0 0
        %1173 = vmatpush1.bf16.msra.mxu0 0
        %1174 = vmatprep.subr.bf16.mxu0 0
        %1175 = vmatpush1.bf16.msra.mxu0 0
        %1176 = vmatprep.subr.bf16.mxu0 0
        %1177 = vmatpush1.bf16.msra.mxu0 0
        %1178 = vmatprep.subr.bf16.mxu0 0
        %1179 = vmatpush1.bf16.msra.mxu0 %v1159
        %1180 = vmatprep.subr.bf16.mxu0 0
        %1181 = vmatpush2.bf16.msra.mxu0 0
        %1182 = vmatprep.subr.bf16.mxu0 0
        %1183 = vmatpush2.bf16.msra.mxu0 0
        %1184 = vmatprep.subr.bf16.mxu0 0
        %1185 = vmatpush2.bf16.msra.mxu0 0
        %1186 = vmatprep.subr.bf16.mxu0 0
        %1187 = vmatpush2.bf16.msra.mxu0 0
        %1188 = vmatprep.subr.bf16.mxu0 0
        %1189 = vmatpush2.bf16.msra.mxu0 0
        %1190 = vmatprep.subr.bf16.mxu0 0
        %1191 = vmatpush2.bf16.msra.mxu0 0
        %1192 = vmatprep.subr.bf16.mxu0 0
        %1193 = vmatpush2.bf16.msra.mxu0 0
        %1194 = vmatprep.subr.bf16.mxu0 0
        %1195 = vmatpush2.bf16.msra.mxu0 0
        %1196 = vmatprep.mubr.bf16.mxu0 0
        %1197 = vmatmul.mubr.bf16.gmra.mxu0 %v1162
        %v1198 = vpop.f32.mrf.mxu0
        %v1199 = vadd.f32 0.0, %v1198
        %v1200 = vpop.f32.mrf.mxu0
        %v1201 = vpop.f32.mrf.mxu0
        %v1202 = vpop.f32.mrf.mxu0
        %1203 = vdwg.mxu0
        %v1204 = vpack.c.bf16 %v1199, %v1199
        %v1205 = vld [vmem:[#allocation9 + $0x30] sm:$0xf]
        %v1206 = vld [vmem:[#allocation9 + $0x34] sm:$0xf]
        %v1207 = vld [vmem:[#allocation9 + $0x38] sm:$0xf]
        %v1208 = vld [vmem:[#allocation9 + $0x3c] sm:$0xf]
        %v1213 = vunpack.c.l.b16 %v1205
        %v1214 = vunpack.c.l.b16 %v1206
        %v1215 = vunpack.c.l.b16 %v1207
        %v1216 = vunpack.c.l.b16 %v1208
        %v1217 = vpack.c.b16 %v1214, %v1213
        %v1218 = vpack.c.b16 %v1216, %v1215
        %v1222 = vsel %vm591, %v1204, 0
        %1224 = vmatprep.subr.bf16.mxu0 0
        %1225 = vmatpush1.bf16.msra.mxu0 0
        %1226 = vmatprep.subr.bf16.mxu0 0
        %1227 = vmatpush1.bf16.msra.mxu0 0
        %1228 = vmatprep.subr.bf16.mxu0 0
        %1229 = vmatpush1.bf16.msra.mxu0 0
        %1230 = vmatprep.subr.bf16.mxu0 0
        %1231 = vmatpush1.bf16.msra.mxu0 0
        %1232 = vmatprep.subr.bf16.mxu0 0
        %1233 = vmatpush1.bf16.msra.mxu0 0
        %1234 = vmatprep.subr.bf16.mxu0 0
        %1235 = vmatpush1.bf16.msra.mxu0 0
        %1236 = vmatprep.subr.bf16.mxu0 0
        %1237 = vmatpush1.bf16.msra.mxu0 %v1218
        %1238 = vmatprep.subr.bf16.mxu0 0
        %1239 = vmatpush1.bf16.msra.mxu0 %v1217
        %1240 = vmatprep.subr.bf16.mxu0 0
        %1241 = vmatpush2.bf16.msra.mxu0 0
        %1242 = vmatprep.subr.bf16.mxu0 0
        %1243 = vmatpush2.bf16.msra.mxu0 0
        %1244 = vmatprep.subr.bf16.mxu0 0
        %1245 = vmatpush2.bf16.msra.mxu0 0
        %1246 = vmatprep.subr.bf16.mxu0 0
        %1247 = vmatpush2.bf16.msra.mxu0 0
        %1248 = vmatprep.subr.bf16.mxu0 0
        %1249 = vmatpush2.bf16.msra.mxu0 0
        %1250 = vmatprep.subr.bf16.mxu0 0
        %1251 = vmatpush2.bf16.msra.mxu0 0
        %1252 = vmatprep.subr.bf16.mxu0 0
        %1253 = vmatpush2.bf16.msra.mxu0 0
        %1254 = vmatprep.subr.bf16.mxu0 0
        %1255 = vmatpush2.bf16.msra.mxu0 0
        %1256 = vmatprep.mubr.bf16.mxu0 0
        %1257 = vmatmul.mubr.bf16.gmra.mxu0 %v1222
        %v1258 = vpop.f32.mrf.mxu0
        %v1259 = vadd.f32 0.0, %v1258
        %v1260 = vpop.f32.mrf.mxu0
        %v1261 = vpop.f32.mrf.mxu0
        %v1262 = vpop.f32.mrf.mxu0
        %1263 = vdwg.mxu0
        %v1264 = vadd.f32 %v1095, %v1259
        %v1265 = vpack.c.bf16 %v1264, %v1264
        %1266 = vst [vmem:[%s300] sm:$0xf] %v1265
        %s1267 = sand.u32 %s156, 1
        %s1268 = scalar_lea.sflag [#allocation5], %s1267
        %s1269 = sand.u32 %s156, 1
        %s1270 = smul.addr %s1269, 4
        %s1271 = scalar_lea.vmem [#allocation11], %s1270
        // Predicated region
        $region61: #{tpu_custom_call.1} parent=39 // pred_check
          %p1272 = pneg %p166
        $region62: #{tpu_custom_call.1} parent=39 // pred_check_branch
          %1274 = sbr.rel (%p1272) target = $region64
        $region63: #{tpu_custom_call.1} parent=39 // pred_region
          %s1276 = ssub.s32 64, 64
          %1277 = vsyncadd %s1268, %s1276
          %s1278 = smul.addr %s28, 2
          %s1279 = sadd.s32 %s29, %s1278
          %s1280 = smul.addr %s1279, 64
          %s1281 = scalar_lea.hbm %s5, %s1280
          %s1283 = sshll.u32 %s1271, 4
          %s1284 = int_to_ptr.vmem [resolvable:$true] %s1283
          %1286 = dma.vmem_to_hbm [thread:$0]  %s1284, 64, %s1281, %s1268
        $region64: #{tpu_custom_call.1} parent=39 // pred_fallthru
          _
      $region40: #{tpu_custom_call.1} parent=5 // pred_fallthru
        _
      %p1287 = scmp.le.s32.totalorder 2, %s19
      // Predicated region
      $region65: #{tpu_custom_call.1} parent=5 // pred_check
        %p1288 = pneg %p1287
      $region66: #{tpu_custom_call.1} parent=5 // pred_check_branch
        %1290 = sbr.rel (%p1288) target = $region68
      $region67: #{tpu_custom_call.1} parent=5 // pred_region
        %s1291 = ssub.s32 %s19, 2
        // Predicated region
        $region69: #{tpu_custom_call.1} parent=67 // pred_check
          %p1292 = pneg %p172
        $region70: #{tpu_custom_call.1} parent=67 // pred_check_branch
          %1294 = sbr.rel (%p1292) target = $region72
        $region71: #{tpu_custom_call.1} parent=67 // pred_region
          %s1295 = sand.u32 %s157, 1
          %s1296 = scalar_lea.sflag [#allocation5], %s1295
          %s1297 = sand.u32 %s157, 1
          %s1298 = smul.addr %s1297, 4
          %s1299 = scalar_lea.vmem [#allocation11], %s1298
          %1300 = dma.done %s1296, 64
        $region72: #{tpu_custom_call.1} parent=67 // pred_fallthru
          _
      $region68: #{tpu_custom_call.1} parent=5 // pred_fallthru
        _
    $region6: #{tpu_custom_call.1} parent=1 // loop_footer
      %s23 = sadd.s32 1, %s19
    $region7: #{tpu_custom_call.1} parent=1 // loop_footer_branch
      %18 = sbr.rel target = $region3
    $region8: #{tpu_custom_call.1} parent=1 // loop_exit
      _
    %1301 = vsyncpa [#allocation4], 1
    %s1302 = scalar_lea.sflag [#allocation4], 1
    %1303 = vsyncpa %s1302, 1
    %1304 = vsyncpa [#allocation7], 1
    %1305 = vsyncpa [#allocation10], 1
    %1306 = vsyncpa [#allocation5], 1
    %s1307 = scalar_lea.sflag [#allocation5], 1
    %1308 = vsyncpa %s1307, 1

</llo_original>
